<compile_context>
chip_gen: v7x
topology: tpu7x:2x2x1
jax: 0.10.0
libtpu: 0.0.40
codegen_flags: <defaults>
</compile_context>

<pallas_src>
import functools

import jax
import jax.numpy as jnp
from jax.experimental import pallas as pl
from jax.experimental.pallas import tpu as pltpu


def _round_up(x, m):
    return ((x + m - 1) // m) * m


def _encoder_kernel(xm_ref, xb_ref, w1_ref, w2_ref, o_ref):
    """One (batch, L-tile) step of Conv1d(stride=win//2, bias=False) + ReLU.

    xm_ref: (K_half, tl)  bf16 -- halves h_{l0} .. h_{l0+tl-1}
    xb_ref: (K_half, 128) bf16 -- halves starting at l0+tl (col 0 = boundary half)
    w1_ref: (N, K_half)   bf16 -- weight[:, :, :stride] flattened
    w2_ref: (N, K_half)   bf16 -- weight[:, :, stride:] flattened
    o_ref : (N, tl)       f32  -- out[b, :, l0:l0+tl]
    """
    xm = xm_ref[...]
    # out[:, l] = W1 @ h_{l0+l} + W2 @ h_{l0+l+1}
    acc = jax.lax.dot_general(
        w1_ref[...], xm,
        dimension_numbers=(((1,), (0,)), ((), ())),
        preferred_element_type=jnp.float32)
    # Second-half operand: shift the halves tile left by one column; the last
    # column is the first half of the next tile (xb_ref column 0).
    xs = jnp.concatenate([xm[:, 1:], xb_ref[:, :1]], axis=1)
    acc = acc + jax.lax.dot_general(
        w2_ref[...], xs,
        dimension_numbers=(((1,), (0,)), ((), ())),
        preferred_element_type=jnp.float32)
    o_ref[...] = jnp.maximum(acc, 0.0).astype(o_ref.dtype)


@functools.partial(jax.jit, static_argnames=("win", "tile_l"))
def encoder_forward(x, weight, *, win, tile_l=None):
    """Conv1d(stride=win//2, bias=False) + ReLU, matching the PyTorch Encoder.

    Args:
      x:      [B, C, T] float32
      weight: [N, C, win] float32 (PyTorch Conv1d weight layout)
      win:    kernel size (stride = win // 2); must be even
      tile_l: optional override of the L tile size (multiple of 128)
    Returns:
      [B, N, L] float32, L = (T - win) // (win // 2) + 1
    """
    B, C, T = x.shape
    N = weight.shape[0]
    if win % 2 != 0:
        # TODO(synk): odd `win` breaks the 50%-overlap halves factorization; would
        # need the generic im2col path instead.
        raise NotImplementedError("encoder_forward requires an even `win`")
    stride = win // 2
    if T < win:
        raise ValueError("T must be >= win")
    L = (T - win) // stride + 1
    H = L + 1                    # number of half-frames covering all frames
    K_half = C * stride

    # --- glue: bf16 cast + halves matrix (pure reshape/transpose; no gather,
    # --- no 2x im2col duplication).  X_half[b, c*stride + j, h] = x[b, c, h*stride + j].
    x_bf = x[:, :, :H * stride].astype(jnp.bfloat16)
    x_half = (x_bf.reshape(B, C, H, stride)
                  .transpose(0, 1, 3, 2)
                  .reshape(B, K_half, H))
    w_bf = weight.astype(jnp.bfloat16)
    w1 = w_bf[:, :, :stride].reshape(N, K_half)     # first-half taps
    w2 = w_bf[:, :, stride:].reshape(N, K_half)     # second-half taps

    # --- L tiling (lane axis).  Large tiles amortize the ~0.35us/step overhead;
    # --- 4096 keeps the double-buffered footprint ~12 MiB (fits v5e/v6e/v7x).
    tl_cap = int(tile_l) if tile_l is not None else 4096
    tl_cap = max(128, (tl_cap // 128) * 128)
    tl = min(tl_cap, _round_up(L, 128))
    if B * pl.cdiv(L, tl) < 2 and L > 128:
        # Keep >= 2 parallel grid blocks so both v7x TensorCores get work.
        tl = _round_up(pl.cdiv(L, 2), 128)
    n_lt = pl.cdiv(L, tl)

    # Pad the halves matrix (zeros) so every main tile and every 128-wide
    # boundary block is fully in bounds.  Padded columns only feed output
    # columns >= L, which are never written back.
    Hp = _round_up(max(n_lt * tl, H), 128)
    if Hp != H:
        x_half = jnp.pad(x_half, ((0, 0), (0, 0), (0, Hp - H)))

    bpt = tl // 128              # boundary-spec (128-wide) blocks per L tile
    max_bblk = Hp // 128 - 1     # clamp so the boundary block never goes OOB

    out = pl.pallas_call(
        _encoder_kernel,
        out_shape=jax.ShapeDtypeStruct((B, N, L), jnp.float32),
        grid_spec=pltpu.PrefetchScalarGridSpec(
            num_scalar_prefetch=0,
            grid=(B, n_lt),
            in_specs=[
                # main halves tile: columns [i*tl, (i+1)*tl)
                pl.BlockSpec((None, K_half, tl), lambda b, i: (b, 0, i)),
                # cross-tile boundary: 128 columns starting at (i+1)*tl (clamped)
                pl.BlockSpec(
                    (None, K_half, 128),
                    lambda b, i: (b, 0, jnp.minimum((i + 1) * bpt, max_bblk))),
                # both weight halves stay resident in VMEM (constant index map)
                pl.BlockSpec((N, K_half), lambda b, i: (0, 0)),
                pl.BlockSpec((N, K_half), lambda b, i: (0, 0)),
            ],
            # Output written directly in [B, N, L] layout, lane-dense, no slice.
            out_specs=pl.BlockSpec((None, N, tl), lambda b, i: (b, 0, i)),
        ),
        compiler_params=pltpu.CompilerParams(
            dimension_semantics=("parallel", "parallel"),
            vmem_limit_bytes=48 * 1024 * 1024,
        ),
    )(x_half, x_half, w1, w2)
    return out                   # [B, N, L] float32


def _reference_forward(x, weight, win):
    """Pure-JAX reference: F.relu(conv1d(x, w, stride=win//2, bias=False))."""
    stride = win // 2
    out = jax.lax.conv_general_dilated(
        x, weight,
        window_strides=(stride,),
        padding="VALID",
        dimension_numbers=("NCH", "OIH", "NCH"),
        precision=jax.lax.Precision.HIGHEST,
    )
    return jnp.maximum(out, 0.0)


if __name__ == "__main__":
    # Module defaults: win=16, fea_dim=256, in_dim=28.
    win, fea_dim, in_dim = 16, 256, 28
    stride = win // 2

    key = jax.random.PRNGKey(0)
    kx, kw = jax.random.split(key)
    # Deterministic synthetic Conv1d weight [out, in, kernel] (no checkpoint load).
    weight = jax.random.normal(kw, (fea_dim, in_dim, win), dtype=jnp.float32) * 0.05

    def check(B, T, tile_l=None):
        x = jax.random.normal(jax.random.fold_in(kx, T), (B, in_dim, T),
                              dtype=jnp.float32)
        out = jax.block_until_ready(
            encoder_forward(x, weight, win=win, tile_l=tile_l))
        L = (T - win) // stride + 1
        assert out.shape == (B, fea_dim, L), out.shape

        # Kernel uses bf16 operands with f32 accumulation; compare against a
        # bf16-quantized-operand f32 reference so only accumulation order differs.
        x_q = x.astype(jnp.bfloat16).astype(jnp.float32)
        w_q = weight.astype(jnp.bfloat16).astype(jnp.float32)
        ref = _reference_forward(x_q, w_q, win)
        err = float(jnp.max(jnp.abs(out - ref)))
        assert jnp.allclose(out, ref, atol=1e-2, rtol=1e-2), err

        # Looser sanity check against the full-f32 reference.
        ref32 = _reference_forward(x, weight, win)
        err32 = float(jnp.max(jnp.abs(out - ref32)))
        assert jnp.allclose(out, ref32, atol=1e-1, rtol=1e-1), err32

    # Small single-tile case (L = 128) -- exercises the boundary-half column of
    # the last frame -- and a forced multi-tile case (L = 384, tile_l=128) that
    # exercises cross-tile stepping and resident-weight reuse.
    check(2, 128 * stride + stride)                 # T = 1032, L = 128
    check(2, 384 * stride + stride, tile_l=128)     # T = 3080, L = 384, 3 tiles

    print("KERNEL_OK")
</pallas_src>

<mosaic_0001>
module attributes {stable_mosaic.version = 11 : i64} {
  func.func @_encoder_kernel(%arg0: i32, %arg1: i32, %arg2: memref<1x224x128xbf16, #tpu.memory_space<vmem>>, %arg3: memref<1x224x128xbf16, #tpu.memory_space<vmem>>, %arg4: memref<256x224xbf16, #tpu.memory_space<vmem>>, %arg5: memref<256x224xbf16, #tpu.memory_space<vmem>>, %arg6: memref<1x256x128xf32, #tpu.memory_space<vmem>>) attributes {dimension_semantics = [#tpu.dimension_semantics<parallel>, #tpu.dimension_semantics<parallel>], iteration_bounds = array<i64: 2, 1>, scalar_prefetch = 0 : i64, scratch_operands = 0 : i64, tpu.core_type = #tpu.core_type<tc>, window_params = [{transform_indices = @transform_0, window_bounds = array<i64: 1, 224, 128>}, {transform_indices = @transform_1, window_bounds = array<i64: 1, 224, 128>}, {pipeline_mode = #tpu.pipeline_mode<synchronous>, transform_indices = @transform_2, window_bounds = array<i64: 256, 224>}, {pipeline_mode = #tpu.pipeline_mode<synchronous>, transform_indices = @transform_3, window_bounds = array<i64: 256, 224>}, {transform_indices = @transform_4, window_bounds = array<i64: 1, 256, 128>}]} {
    %c0 = arith.constant 0 : index
    %c0_0 = arith.constant 0 : index
    %c0_1 = arith.constant 0 : index
    %0 = vector.load %arg2[%c0, %c0_0, %c0_1] : memref<1x224x128xbf16, #tpu.memory_space<vmem>>, vector<1x224x128xbf16>
    %1 = vector.shape_cast %0 : vector<1x224x128xbf16> to vector<224x128xbf16>
    %c0_2 = arith.constant 0 : index
    %c0_3 = arith.constant 0 : index
    %2 = vector.load %arg4[%c0_2, %c0_3] : memref<256x224xbf16, #tpu.memory_space<vmem>>, vector<256x224xbf16>
    %cst = arith.constant dense<0.000000e+00> : vector<256x128xf32>
    %3 = tpu.matmul %2, %1, %cst {dimension_numbers = #tpu.dot_dimension_numbers<[1], [0], [0], [1], [0, 0, 1, 1], [], []>} : vector<256x224xbf16>, vector<224x128xbf16>, vector<256x128xf32> -> vector<256x128xf32>
    %4 = vector.extract_strided_slice %1 {offsets = [0, 1], sizes = [224, 127], strides = [1, 1]} : vector<224x128xbf16> to vector<224x127xbf16>
    %c0_4 = arith.constant 0 : index
    %c0_5 = arith.constant 0 : index
    %c0_6 = arith.constant 0 : index
    %5 = vector.load %arg3[%c0_4, %c0_5, %c0_6] : memref<1x224x128xbf16, #tpu.memory_space<vmem>>, vector<1x224x1xbf16>
    %6 = vector.shape_cast %5 : vector<1x224x1xbf16> to vector<224x1xbf16>
    %7 = tpu.concatenate %4, %6 in 1 : vector<224x127xbf16>, vector<224x1xbf16> -> vector<224x128xbf16>
    %c0_7 = arith.constant 0 : index
    %c0_8 = arith.constant 0 : index
    %8 = vector.load %arg5[%c0_7, %c0_8] : memref<256x224xbf16, #tpu.memory_space<vmem>>, vector<256x224xbf16>
    %cst_9 = arith.constant dense<0.000000e+00> : vector<256x128xf32>
    %9 = tpu.matmul %8, %7, %cst_9 {dimension_numbers = #tpu.dot_dimension_numbers<[1], [0], [0], [1], [0, 0, 1, 1], [], []>} : vector<256x224xbf16>, vector<224x128xbf16>, vector<256x128xf32> -> vector<256x128xf32>
    %10 = arith.addf %3, %9 : vector<256x128xf32>
    %cst_10 = arith.constant 0.000000e+00 : f32
    %11 = vector.broadcast %cst_10 : f32 to vector<256x128xf32>
    %12 = arith.maximumf %10, %11 : vector<256x128xf32>
    %c0_11 = arith.constant 0 : index
    %c0_12 = arith.constant 0 : index
    %c0_13 = arith.constant 0 : index
    %13 = vector.load %arg6[%c0_11, %c0_12, %c0_13] : memref<1x256x128xf32, #tpu.memory_space<vmem>>, vector<1x256x128xf32>
    %14 = vector.shape_cast %13 : vector<1x256x128xf32> to vector<256x128xf32>
    %15 = vector.shape_cast %12 : vector<256x128xf32> to vector<1x256x128xf32>
    tpu.vector_store %arg6[%c0_11, %c0_12, %c0_13], %15 {strides = array<i32>} : memref<1x256x128xf32, #tpu.memory_space<vmem>>, vector<1x256x128xf32>,
    return
  }
  func.func @transform_0(%arg0: i32, %arg1: i32) -> (i32, i32, i32) {
    %c0_i32 = arith.constant 0 : i32
    %c0_i32_0 = arith.constant 0 : i32
    return %arg0, %c0_i32, %arg1 : i32, i32, i32
  }
  func.func @transform_1(%arg0: i32, %arg1: i32) -> (i32, i32, i32) {
    %c1_i32 = arith.constant 1 : i32
    %0 = arith.addi %arg1, %c1_i32 : i32
    %c1_i32_0 = arith.constant 1 : i32
    %1 = arith.muli %0, %c1_i32_0 : i32
    %c1_i32_1 = arith.constant 1 : i32
    %2 = arith.minsi %1, %c1_i32_1 : i32
    %c0_i32 = arith.constant 0 : i32
    %c0_i32_2 = arith.constant 0 : i32
    return %arg0, %c0_i32, %2 : i32, i32, i32
  }
  func.func @transform_2(%arg0: i32, %arg1: i32) -> (i32, i32) {
    %c0_i32 = arith.constant 0 : i32
    %c0_i32_0 = arith.constant 0 : i32
    %c0_i32_1 = arith.constant 0 : i32
    return %c0_i32, %c0_i32_0 : i32, i32
  }
  func.func @transform_3(%arg0: i32, %arg1: i32) -> (i32, i32) {
    %c0_i32 = arith.constant 0 : i32
    %c0_i32_0 = arith.constant 0 : i32
    %c0_i32_1 = arith.constant 0 : i32
    return %c0_i32, %c0_i32_0 : i32, i32
  }
  func.func @transform_4(%arg0: i32, %arg1: i32) -> (i32, i32, i32) {
    %c0_i32 = arith.constant 0 : i32
    %c0_i32_0 = arith.constant 0 : i32
    return %arg0, %c0_i32, %arg1 : i32, i32, i32
  }
}

</mosaic_0001>

<llo_original>
// kernel: encoder_forward.1
$region0: #{encoder_forward.1}
  #allocation0 [shape = 'u32[]', space=smem, size = 0x4, offset = 0x4, fixed_abs, tag = 'smem constant byte address 0x4 - core index']
  #allocation1 [shape = 'u32[144,128]{1,0:T(1,128)}', space=vmem, size = 0x12000, scoped, tag = 'internal scratch']
  %s0 = inlined_call_operand.vmem [shape: bf16[2,224,256], index: 0, kind: input, shape index: {}, may-alias: {0,1}]
  %s1 = inlined_call_operand.vmem [shape: bf16[2,224,256], index: 1, kind: input, shape index: {}, may-alias: {0,1}]
  %s2 = inlined_call_operand.vmem [shape: bf16[256,224], index: 2, kind: input, shape index: {}]
  %s3 = inlined_call_operand.vmem [shape: bf16[256,224], index: 3, kind: input, shape index: {}]
  %s4 = inlined_call_operand.hbm [shape: f32[2,256,128], index: 4, kind: output, shape index: {}]
  %s5 = sld [smem:[#allocation0]]
  $region131: #{encoder_forward.1} parent=0
    _
  %s7 = ssub.s32 1, %s5
  %s8 = scalar_select 0, %s7, %s5
  $region1: #{encoder_forward.1} parent=0
    #allocation2 [shape = 'u8[114688]{0}', space=vmem, size = 0x1c000, scoped, tag = 'input window, operand 0']
    #allocation3 [shape = 'u8[114688]{0}', space=vmem, size = 0x1c000, scoped, tag = 'input window, operand 1']
    #allocation4 [shape = 'u8[262144]{0}', space=vmem, size = 0x40000, scoped, tag = 'output window, operand 0']
    #allocation5 [shape = 's32[2]{0}', space=sflag, size = 0x8, scoped, tag = 'scoped memory for encoder_forward.1']
    %9 = vsyncpa [#allocation5], 0
    %s10 = scalar_lea.sflag [#allocation5], 1
    %11 = vsyncpa %s10, 0
    loop: start=0, step=1, limit=4
    $region2: #{encoder_forward.1} parent=1 // loop_pre_header
      _
    $region3: #{encoder_forward.1} parent=1 // loop_header
      %s13 = sphi 0, %s17
      %p14 = scmp.ge.s32.totalorder %s13, 4
      %s20 = sphi 0, %s32
      %s21 = sphi 0, %s28
      %s22 = sphi 0, %s20
      %s23 = sphi 0, %s21
      %s24 = sphi 0, %s22
      %s25 = sphi 0, %s23
      %s37 = sphi 0, %s39
      %s40 = sphi 0, %s37
      %s41 = sphi 0, %s40
      %s57 = sphi 0, %s41
      %s71 = sphi 0, %s73
      %s74 = sphi 0, %s71
      %s75 = sphi 0, %s74
      %s91 = sphi 0, %s75
      %s95 = sphi 0, %s95
      %s97 = sphi 0, %s95
      %s98 = sphi 0, %s97
      %s112 = sphi 0, %s98
      %s116 = sphi 0, %s116
      %s118 = sphi 0, %s116
      %s119 = sphi 0, %s118
      %s133 = sphi 0, %s119
      %s141 = sphi 0, %s143
      %s144 = sphi 0, %s141
      %s145 = sphi 0, %s144
      %s161 = sphi 0, %s145
    $region4: #{encoder_forward.1} parent=1 // loop_header_branch
      %16 = sbr.rel (%p14) target = $region8
    $region5: #{encoder_forward.1} parent=1 // loop_body
      %s18 = ssub.s32 %s13, 1
      %s19 = ssub.s32 %s13, 2
      %s26 = sadd.s32 1, %s21
      %p27 = scmp.ge.s32.totalorder %s26, 1
      %s28 = scalar_select %p27, 0, %s26
      %s29 = sadd.s32 1, %s20
      %s30 = scalar_select %p27, %s29, %s20
      %p31 = scmp.ge.s32.totalorder %s30, 2
      %s32 = scalar_select %p31, 0, %s30
      %s33 = ssub.s32 %s20, %s32
      %s34 = ssub.s32 %s21, %s28
      %s35 = sor.u32 %s33, %s34
      %p36 = scmp.eq.s32.totalorder %s35, 0
      %s38 = sadd.s32 %s37, 1
      %s39 = scalar_select %p36, %s37, %s38
      %p42 = pneg %p36
      %p43 = scmp.eq.s32.totalorder %s13, 1
      %p44 = por %p42, %p43
      %p45 = scmp.ne.s32.totalorder %s37, %s40
      %p46 = scmp.eq.s32.totalorder %s13, 0
      %p47 = por %p45, %p46
      %p48 = scmp.ne.s32.totalorder %s37, %s40
      %p49 = scmp.eq.s32.totalorder %s18, 1
      %p50 = por %p48, %p49
      %p51 = scmp.ne.s32.totalorder %s40, %s41
      %p52 = scmp.eq.s32.totalorder %s18, 0
      %p53 = por %p51, %p52
      %p54 = scmp.ne.s32.totalorder %s40, %s41
      %p55 = scmp.eq.s32.totalorder %s19, 1
      %p56 = por %p54, %p55
      %p58 = scmp.ne.s32.totalorder %s41, %s57
      %p59 = scmp.eq.s32.totalorder %s19, 0
      %p60 = por %p58, %p59
      %s61 = sadd.s32 %s21, 1
      %p62 = scmp.lt.s32.totalorder %s61, 1
      %s63 = scalar_select %p62, %s61, 1
      %s64 = sadd.s32 %s28, 1
      %p65 = scmp.lt.s32.totalorder %s64, 1
      %s66 = scalar_select %p65, %s64, 1
      %s67 = ssub.s32 %s20, %s32
      %s68 = ssub.s32 %s63, %s66
      %s69 = sor.u32 %s67, %s68
      %p70 = scmp.eq.s32.totalorder %s69, 0
      %s72 = sadd.s32 %s71, 1
      %s73 = scalar_select %p70, %s71, %s72
      %p76 = pneg %p70
      %p77 = scmp.eq.s32.totalorder %s13, 1
      %p78 = por %p76, %p77
      %p79 = scmp.ne.s32.totalorder %s71, %s74
      %p80 = scmp.eq.s32.totalorder %s13, 0
      %p81 = por %p79, %p80
      %p82 = scmp.ne.s32.totalorder %s71, %s74
      %p83 = scmp.eq.s32.totalorder %s18, 1
      %p84 = por %p82, %p83
      %p85 = scmp.ne.s32.totalorder %s74, %s75
      %p86 = scmp.eq.s32.totalorder %s18, 0
      %p87 = por %p85, %p86
      %p88 = scmp.ne.s32.totalorder %s74, %s75
      %p89 = scmp.eq.s32.totalorder %s19, 1
      %p90 = por %p88, %p89
      %p92 = scmp.ne.s32.totalorder %s75, %s91
      %p93 = scmp.eq.s32.totalorder %s19, 0
      %p94 = por %p92, %p93
      %s96 = sadd.s32 %s95, 1
      %p99 = scmp.eq.s32.totalorder %s13, 1
      %p100 = scmp.ne.s32.totalorder %s95, %s97
      %p101 = scmp.eq.s32.totalorder %s13, 0
      %p102 = por %p100, %p101
      %p103 = scmp.ne.s32.totalorder %s95, %s97
      %p104 = scmp.eq.s32.totalorder %s18, 1
      %p105 = por %p103, %p104
      %p106 = scmp.ne.s32.totalorder %s97, %s98
      %p107 = scmp.eq.s32.totalorder %s18, 0
      %p108 = por %p106, %p107
      %p109 = scmp.ne.s32.totalorder %s97, %s98
      %p110 = scmp.eq.s32.totalorder %s19, 1
      %p111 = por %p109, %p110
      %p113 = scmp.ne.s32.totalorder %s98, %s112
      %p114 = scmp.eq.s32.totalorder %s19, 0
      %p115 = por %p113, %p114
      %s117 = sadd.s32 %s116, 1
      %p120 = scmp.eq.s32.totalorder %s13, 1
      %p121 = scmp.ne.s32.totalorder %s116, %s118
      %p122 = scmp.eq.s32.totalorder %s13, 0
      %p123 = por %p121, %p122
      %p124 = scmp.ne.s32.totalorder %s116, %s118
      %p125 = scmp.eq.s32.totalorder %s18, 1
      %p126 = por %p124, %p125
      %p127 = scmp.ne.s32.totalorder %s118, %s119
      %p128 = scmp.eq.s32.totalorder %s18, 0
      %p129 = por %p127, %p128
      %p130 = scmp.ne.s32.totalorder %s118, %s119
      %p131 = scmp.eq.s32.totalorder %s19, 1
      %p132 = por %p130, %p131
      %p134 = scmp.ne.s32.totalorder %s119, %s133
      %p135 = scmp.eq.s32.totalorder %s19, 0
      %p136 = por %p134, %p135
      %s137 = ssub.s32 %s20, %s32
      %s138 = ssub.s32 %s21, %s28
      %s139 = sor.u32 %s137, %s138
      %p140 = scmp.eq.s32.totalorder %s139, 0
      %s142 = sadd.s32 %s141, 1
      %s143 = scalar_select %p140, %s141, %s142
      %p146 = pneg %p140
      %p147 = scmp.eq.s32.totalorder %s13, 1
      %p148 = por %p146, %p147
      %p149 = scmp.ne.s32.totalorder %s141, %s144
      %p150 = scmp.eq.s32.totalorder %s13, 0
      %p151 = por %p149, %p150
      %p152 = scmp.ne.s32.totalorder %s141, %s144
      %p153 = scmp.eq.s32.totalorder %s18, 1
      %p154 = por %p152, %p153
      %p155 = scmp.ne.s32.totalorder %s144, %s145
      %p156 = scmp.eq.s32.totalorder %s18, 0
      %p157 = por %p155, %p156
      %p158 = scmp.ne.s32.totalorder %s144, %s145
      %p159 = scmp.eq.s32.totalorder %s19, 1
      %p160 = por %p158, %p159
      %p162 = scmp.ne.s32.totalorder %s145, %s161
      %p163 = scmp.eq.s32.totalorder %s19, 0
      %p164 = por %p162, %p163
      %p165 = scmp.le.s32.totalorder 1, %s13
      %p166 = scmp.lt.s32.totalorder %s13, 3
      %p167 = pnand %p165, %p166
      %p168 = pneg %p167
      // Predicated region
      $region9: #{encoder_forward.1} parent=5 // pred_check
        _
      $region10: #{encoder_forward.1} parent=5 // pred_check_branch
        %170 = sbr.rel (%p167) target = $region12
      $region11: #{encoder_forward.1} parent=5 // pred_region
        %s171 = ssub.s32 %s13, 1
        // Predicated region
        $region13: #{encoder_forward.1} parent=11 // pred_check
          %p172 = pneg %p108
        $region14: #{encoder_forward.1} parent=11 // pred_check_branch
          %174 = sbr.rel (%p172) target = $region16
        $region15: #{encoder_forward.1} parent=11 // pred_region
          _
        $region16: #{encoder_forward.1} parent=11 // pred_fallthru
          _
        // Predicated region
        $region17: #{encoder_forward.1} parent=11 // pred_check
          %p175 = pneg %p129
        $region18: #{encoder_forward.1} parent=11 // pred_check_branch
          %177 = sbr.rel (%p175) target = $region20
        $region19: #{encoder_forward.1} parent=11 // pred_region
          _
        $region20: #{encoder_forward.1} parent=11 // pred_fallthru
          _
      $region12: #{encoder_forward.1} parent=5 // pred_fallthru
        _
      %p178 = scmp.lt.s32.totalorder %s13, 2
      // Predicated region
      $region21: #{encoder_forward.1} parent=5 // pred_check
        %p179 = pneg %p178
      $region22: #{encoder_forward.1} parent=5 // pred_check_branch
        %181 = sbr.rel (%p179) target = $region24
      $region23: #{encoder_forward.1} parent=5 // pred_region
        // Predicated region
        $region25: #{encoder_forward.1} parent=23 // pred_check
          %p182 = pneg %p47
        $region26: #{encoder_forward.1} parent=23 // pred_check_branch
          %184 = sbr.rel (%p182) target = $region28
        $region27: #{encoder_forward.1} parent=23 // pred_region
          %s185 = sand.u32 %s37, 1
          %s186 = sand.u32 %s37, 1
          %s187 = smul.addr %s186, 112
          %s188 = scalar_lea.vmem [#allocation2], %s187
          %s189 = smul.addr %s20, 56
          %s190 = sadd.s32 %s21, %s189
          %s191 = smul.addr %s190, 4
          %s192 = scalar_lea.vmem %s0, %s191
          // Predicated region
          $region29: #{encoder_forward.1} parent=27 // pred_check
            _
          $region30: #{encoder_forward.1} parent=27 // pred_check_branch
            %194 = sbr.rel (0) target = $region32
          $region31: #{encoder_forward.1} parent=27 // pred_region
            // Predicated region
            $region33: #{encoder_forward.1} parent=31 // pred_check
              _
            $region34: #{encoder_forward.1} parent=31 // pred_check_branch
              %196 = sbr.rel target = $region36
            $region35: #{encoder_forward.1} parent=31 // pred_region
              // Predicated region
              $region48: #{encoder_forward.1} parent=35 // pred_check
                _
              $region49: #{encoder_forward.1} parent=35 // pred_check_branch
                %265 = sbr.rel (0) target = $region51
              $region50: #{encoder_forward.1} parent=35 // pred_region
                loop: start=0, step=1, limit=1
                $region52: #{encoder_forward.1} parent=50 // loop_pre_header
                  _
                $region53: #{encoder_forward.1} parent=50 // loop_header
                  %s267 = sphi 0, %s271
                  %p268 = scmp.ge.s32.totalorder %s267, 1
                  %s272 = sphi %s192, %s192
                  %s273 = sphi %s188, %s188
                $region54: #{encoder_forward.1} parent=50 // loop_header_branch
                  %270 = sbr.rel (%p268) target = $region58
                $region55: #{encoder_forward.1} parent=50 // loop_body
                  _
                $region56: #{encoder_forward.1} parent=50 // loop_footer
                  %s271 = sadd.s32 1, %s267
                $region57: #{encoder_forward.1} parent=50 // loop_footer_branch
                  %266 = sbr.rel target = $region53
                $region58: #{encoder_forward.1} parent=50 // loop_exit
                  _
                loop: start=0, step=1, limit=1
                $region59: #{encoder_forward.1} parent=50 // loop_pre_header
                  _
                $region60: #{encoder_forward.1} parent=50 // loop_header
                  %s276 = sphi 0, %s280
                  %p277 = scmp.ge.s32.totalorder %s276, 1
                  %s281 = sphi %s192, %s192
                  %s282 = sphi %s188, %s188
                $region61: #{encoder_forward.1} parent=50 // loop_header_branch
                  %279 = sbr.rel (%p277) target = $region65
                $region62: #{encoder_forward.1} parent=50 // loop_body
                  %v283 = vld [vmem:[%s281] sm:$0xf]
                  %284 = vst [vmem:[%s282] sm:$0xf] %v283
                  %v285 = vld [vmem:[%s281 + $0x8] sm:$0xf]
                  %286 = vst [vmem:[%s282 + $0x4] sm:$0xf] %v285
                  %v287 = vld [vmem:[%s281 + $0x10] sm:$0xf]
                  %288 = vst [vmem:[%s282 + $0x8] sm:$0xf] %v287
                  %v289 = vld [vmem:[%s281 + $0x18] sm:$0xf]
                  %290 = vst [vmem:[%s282 + $0xc] sm:$0xf] %v289
                  %v291 = vld [vmem:[%s281 + $0x20] sm:$0xf]
                  %292 = vst [vmem:[%s282 + $0x10] sm:$0xf] %v291
                  %v293 = vld [vmem:[%s281 + $0x28] sm:$0xf]
                  %294 = vst [vmem:[%s282 + $0x14] sm:$0xf] %v293
                  %v295 = vld [vmem:[%s281 + $0x30] sm:$0xf]
                  %296 = vst [vmem:[%s282 + $0x18] sm:$0xf] %v295
                  %v297 = vld [vmem:[%s281 + $0x38] sm:$0xf]
                  %298 = vst [vmem:[%s282 + $0x1c] sm:$0xf] %v297
                  %v299 = vld [vmem:[%s281 + $0x40] sm:$0xf]
                  %300 = vst [vmem:[%s282 + $0x20] sm:$0xf] %v299
                  %v301 = vld [vmem:[%s281 + $0x48] sm:$0xf]
                  %302 = vst [vmem:[%s282 + $0x24] sm:$0xf] %v301
                  %v303 = vld [vmem:[%s281 + $0x50] sm:$0xf]
                  %304 = vst [vmem:[%s282 + $0x28] sm:$0xf] %v303
                  %v305 = vld [vmem:[%s281 + $0x58] sm:$0xf]
                  %306 = vst [vmem:[%s282 + $0x2c] sm:$0xf] %v305
                  %v307 = vld [vmem:[%s281 + $0x60] sm:$0xf]
                  %308 = vst [vmem:[%s282 + $0x30] sm:$0xf] %v307
                  %v309 = vld [vmem:[%s281 + $0x68] sm:$0xf]
                  %310 = vst [vmem:[%s282 + $0x34] sm:$0xf] %v309
                  %v311 = vld [vmem:[%s281 + $0x70] sm:$0xf]
                  %312 = vst [vmem:[%s282 + $0x38] sm:$0xf] %v311
                  %v313 = vld [vmem:[%s281 + $0x78] sm:$0xf]
                  %314 = vst [vmem:[%s282 + $0x3c] sm:$0xf] %v313
                  %v315 = vld [vmem:[%s281 + $0x80] sm:$0xf]
                  %316 = vst [vmem:[%s282 + $0x40] sm:$0xf] %v315
                  %v317 = vld [vmem:[%s281 + $0x88] sm:$0xf]
                  %318 = vst [vmem:[%s282 + $0x44] sm:$0xf] %v317
                  %v319 = vld [vmem:[%s281 + $0x90] sm:$0xf]
                  %320 = vst [vmem:[%s282 + $0x48] sm:$0xf] %v319
                  %v321 = vld [vmem:[%s281 + $0x98] sm:$0xf]
                  %322 = vst [vmem:[%s282 + $0x4c] sm:$0xf] %v321
                  %v323 = vld [vmem:[%s281 + $0xa0] sm:$0xf]
                  %324 = vst [vmem:[%s282 + $0x50] sm:$0xf] %v323
                  %v325 = vld [vmem:[%s281 + $0xa8] sm:$0xf]
                  %326 = vst [vmem:[%s282 + $0x54] sm:$0xf] %v325
                  %v327 = vld [vmem:[%s281 + $0xb0] sm:$0xf]
                  %328 = vst [vmem:[%s282 + $0x58] sm:$0xf] %v327
                  %v329 = vld [vmem:[%s281 + $0xb8] sm:$0xf]
                  %330 = vst [vmem:[%s282 + $0x5c] sm:$0xf] %v329
                  %v331 = vld [vmem:[%s281 + $0xc0] sm:$0xf]
                  %332 = vst [vmem:[%s282 + $0x60] sm:$0xf] %v331
                  %v333 = vld [vmem:[%s281 + $0xc8] sm:$0xf]
                  %334 = vst [vmem:[%s282 + $0x64] sm:$0xf] %v333
                  %v335 = vld [vmem:[%s281 + $0xd0] sm:$0xf]
                  %336 = vst [vmem:[%s282 + $0x68] sm:$0xf] %v335
                  %v337 = vld [vmem:[%s281 + $0xd8] sm:$0xf]
                  %338 = vst [vmem:[%s282 + $0x6c] sm:$0xf] %v337
                $region63: #{encoder_forward.1} parent=50 // loop_footer
                  %s280 = sadd.s32 1, %s276
                $region64: #{encoder_forward.1} parent=50 // loop_footer_branch
                  %275 = sbr.rel target = $region60
                $region65: #{encoder_forward.1} parent=50 // loop_exit
                  _
              $region51: #{encoder_forward.1} parent=35 // pred_fallthru
                _
            $region36: #{encoder_forward.1} parent=31 // pred_fallthru
              _
            // Predicated region
            $region37: #{encoder_forward.1} parent=31 // pred_check
              _
            $region38: #{encoder_forward.1} parent=31 // pred_check_branch
              %198 = sbr.rel (0) target = $region40
            $region39: #{encoder_forward.1} parent=31 // pred_region
              loop: start=0, step=1, limit=1
              $region41: #{encoder_forward.1} parent=39 // loop_pre_header
                _
              $region42: #{encoder_forward.1} parent=39 // loop_header
                %s201 = sphi 0, %s205
                %p202 = scmp.ge.s32.totalorder %s201, 1
                %s206 = sphi %s192, %s192
                %s207 = sphi %s188, %s188
              $region43: #{encoder_forward.1} parent=39 // loop_header_branch
                %204 = sbr.rel (%p202) target = $region47
              $region44: #{encoder_forward.1} parent=39 // loop_body
                %v208 = vld [vmem:[%s206] sm:$0xf]
                %209 = vst [vmem:[%s207] sm:$0xf] %v208
                %v210 = vld [vmem:[%s206 + $0x8] sm:$0xf]
                %211 = vst [vmem:[%s207 + $0x4] sm:$0xf] %v210
                %v212 = vld [vmem:[%s206 + $0x10] sm:$0xf]
                %213 = vst [vmem:[%s207 + $0x8] sm:$0xf] %v212
                %v214 = vld [vmem:[%s206 + $0x18] sm:$0xf]
                %215 = vst [vmem:[%s207 + $0xc] sm:$0xf] %v214
                %v216 = vld [vmem:[%s206 + $0x20] sm:$0xf]
                %217 = vst [vmem:[%s207 + $0x10] sm:$0xf] %v216
                %v218 = vld [vmem:[%s206 + $0x28] sm:$0xf]
                %219 = vst [vmem:[%s207 + $0x14] sm:$0xf] %v218
                %v220 = vld [vmem:[%s206 + $0x30] sm:$0xf]
                %221 = vst [vmem:[%s207 + $0x18] sm:$0xf] %v220
                %v222 = vld [vmem:[%s206 + $0x38] sm:$0xf]
                %223 = vst [vmem:[%s207 + $0x1c] sm:$0xf] %v222
                %v224 = vld [vmem:[%s206 + $0x40] sm:$0xf]
                %225 = vst [vmem:[%s207 + $0x20] sm:$0xf] %v224
                %v226 = vld [vmem:[%s206 + $0x48] sm:$0xf]
                %227 = vst [vmem:[%s207 + $0x24] sm:$0xf] %v226
                %v228 = vld [vmem:[%s206 + $0x50] sm:$0xf]
                %229 = vst [vmem:[%s207 + $0x28] sm:$0xf] %v228
                %v230 = vld [vmem:[%s206 + $0x58] sm:$0xf]
                %231 = vst [vmem:[%s207 + $0x2c] sm:$0xf] %v230
                %v232 = vld [vmem:[%s206 + $0x60] sm:$0xf]
                %233 = vst [vmem:[%s207 + $0x30] sm:$0xf] %v232
                %v234 = vld [vmem:[%s206 + $0x68] sm:$0xf]
                %235 = vst [vmem:[%s207 + $0x34] sm:$0xf] %v234
                %v236 = vld [vmem:[%s206 + $0x70] sm:$0xf]
                %237 = vst [vmem:[%s207 + $0x38] sm:$0xf] %v236
                %v238 = vld [vmem:[%s206 + $0x78] sm:$0xf]
                %239 = vst [vmem:[%s207 + $0x3c] sm:$0xf] %v238
                %v240 = vld [vmem:[%s206 + $0x80] sm:$0xf]
                %241 = vst [vmem:[%s207 + $0x40] sm:$0xf] %v240
                %v242 = vld [vmem:[%s206 + $0x88] sm:$0xf]
                %243 = vst [vmem:[%s207 + $0x44] sm:$0xf] %v242
                %v244 = vld [vmem:[%s206 + $0x90] sm:$0xf]
                %245 = vst [vmem:[%s207 + $0x48] sm:$0xf] %v244
                %v246 = vld [vmem:[%s206 + $0x98] sm:$0xf]
                %247 = vst [vmem:[%s207 + $0x4c] sm:$0xf] %v246
                %v248 = vld [vmem:[%s206 + $0xa0] sm:$0xf]
                %249 = vst [vmem:[%s207 + $0x50] sm:$0xf] %v248
                %v250 = vld [vmem:[%s206 + $0xa8] sm:$0xf]
                %251 = vst [vmem:[%s207 + $0x54] sm:$0xf] %v250
                %v252 = vld [vmem:[%s206 + $0xb0] sm:$0xf]
                %253 = vst [vmem:[%s207 + $0x58] sm:$0xf] %v252
                %v254 = vld [vmem:[%s206 + $0xb8] sm:$0xf]
                %255 = vst [vmem:[%s207 + $0x5c] sm:$0xf] %v254
                %v256 = vld [vmem:[%s206 + $0xc0] sm:$0xf]
                %257 = vst [vmem:[%s207 + $0x60] sm:$0xf] %v256
                %v258 = vld [vmem:[%s206 + $0xc8] sm:$0xf]
                %259 = vst [vmem:[%s207 + $0x64] sm:$0xf] %v258
                %v260 = vld [vmem:[%s206 + $0xd0] sm:$0xf]
                %261 = vst [vmem:[%s207 + $0x68] sm:$0xf] %v260
                %v262 = vld [vmem:[%s206 + $0xd8] sm:$0xf]
                %263 = vst [vmem:[%s207 + $0x6c] sm:$0xf] %v262
              $region45: #{encoder_forward.1} parent=39 // loop_footer
                %s205 = sadd.s32 1, %s201
              $region46: #{encoder_forward.1} parent=39 // loop_footer_branch
                %200 = sbr.rel target = $region42
              $region47: #{encoder_forward.1} parent=39 // loop_exit
                _
            $region40: #{encoder_forward.1} parent=31 // pred_fallthru
              _
          $region32: #{encoder_forward.1} parent=27 // pred_fallthru
            _
          %339 = vnop
        $region28: #{encoder_forward.1} parent=23 // pred_fallthru
          _
        // Predicated region
        $region66: #{encoder_forward.1} parent=23 // pred_check
          %p340 = pneg %p81
        $region67: #{encoder_forward.1} parent=23 // pred_check_branch
          %342 = sbr.rel (%p340) target = $region69
        $region68: #{encoder_forward.1} parent=23 // pred_region
          %s343 = sand.u32 %s71, 1
          %s344 = sand.u32 %s71, 1
          %s345 = smul.addr %s344, 112
          %s346 = scalar_lea.vmem [#allocation3], %s345
          %s347 = sadd.s32 %s21, 1
          %p348 = scmp.lt.s32.totalorder %s347, 1
          %s349 = scalar_select %p348, %s347, 1
          %s350 = smul.addr %s20, 56
          %s351 = sadd.s32 %s349, %s350
          %s352 = smul.addr %s351, 4
          %s353 = scalar_lea.vmem %s1, %s352
          // Predicated region
          $region70: #{encoder_forward.1} parent=68 // pred_check
            _
          $region71: #{encoder_forward.1} parent=68 // pred_check_branch
            %355 = sbr.rel (0) target = $region73
          $region72: #{encoder_forward.1} parent=68 // pred_region
            // Predicated region
            $region74: #{encoder_forward.1} parent=72 // pred_check
              _
            $region75: #{encoder_forward.1} parent=72 // pred_check_branch
              %357 = sbr.rel target = $region77
            $region76: #{encoder_forward.1} parent=72 // pred_region
              // Predicated region
              $region89: #{encoder_forward.1} parent=76 // pred_check
                _
              $region90: #{encoder_forward.1} parent=76 // pred_check_branch
                %426 = sbr.rel (0) target = $region92
              $region91: #{encoder_forward.1} parent=76 // pred_region
                loop: start=0, step=1, limit=1
                $region93: #{encoder_forward.1} parent=91 // loop_pre_header
                  _
                $region94: #{encoder_forward.1} parent=91 // loop_header
                  %s428 = sphi 0, %s432
                  %p429 = scmp.ge.s32.totalorder %s428, 1
                  %s433 = sphi %s353, %s353
                  %s434 = sphi %s346, %s346
                $region95: #{encoder_forward.1} parent=91 // loop_header_branch
                  %431 = sbr.rel (%p429) target = $region99
                $region96: #{encoder_forward.1} parent=91 // loop_body
                  _
                $region97: #{encoder_forward.1} parent=91 // loop_footer
                  %s432 = sadd.s32 1, %s428
                $region98: #{encoder_forward.1} parent=91 // loop_footer_branch
                  %427 = sbr.rel target = $region94
                $region99: #{encoder_forward.1} parent=91 // loop_exit
                  _
                loop: start=0, step=1, limit=1
                $region100: #{encoder_forward.1} parent=91 // loop_pre_header
                  _
                $region101: #{encoder_forward.1} parent=91 // loop_header
                  %s437 = sphi 0, %s441
                  %p438 = scmp.ge.s32.totalorder %s437, 1
                  %s442 = sphi %s353, %s353
                  %s443 = sphi %s346, %s346
                $region102: #{encoder_forward.1} parent=91 // loop_header_branch
                  %440 = sbr.rel (%p438) target = $region106
                $region103: #{encoder_forward.1} parent=91 // loop_body
                  %v444 = vld [vmem:[%s442] sm:$0xf]
                  %445 = vst [vmem:[%s443] sm:$0xf] %v444
                  %v446 = vld [vmem:[%s442 + $0x8] sm:$0xf]
                  %447 = vst [vmem:[%s443 + $0x4] sm:$0xf] %v446
                  %v448 = vld [vmem:[%s442 + $0x10] sm:$0xf]
                  %449 = vst [vmem:[%s443 + $0x8] sm:$0xf] %v448
                  %v450 = vld [vmem:[%s442 + $0x18] sm:$0xf]
                  %451 = vst [vmem:[%s443 + $0xc] sm:$0xf] %v450
                  %v452 = vld [vmem:[%s442 + $0x20] sm:$0xf]
                  %453 = vst [vmem:[%s443 + $0x10] sm:$0xf] %v452
                  %v454 = vld [vmem:[%s442 + $0x28] sm:$0xf]
                  %455 = vst [vmem:[%s443 + $0x14] sm:$0xf] %v454
                  %v456 = vld [vmem:[%s442 + $0x30] sm:$0xf]
                  %457 = vst [vmem:[%s443 + $0x18] sm:$0xf] %v456
                  %v458 = vld [vmem:[%s442 + $0x38] sm:$0xf]
                  %459 = vst [vmem:[%s443 + $0x1c] sm:$0xf] %v458
                  %v460 = vld [vmem:[%s442 + $0x40] sm:$0xf]
                  %461 = vst [vmem:[%s443 + $0x20] sm:$0xf] %v460
                  %v462 = vld [vmem:[%s442 + $0x48] sm:$0xf]
                  %463 = vst [vmem:[%s443 + $0x24] sm:$0xf] %v462
                  %v464 = vld [vmem:[%s442 + $0x50] sm:$0xf]
                  %465 = vst [vmem:[%s443 + $0x28] sm:$0xf] %v464
                  %v466 = vld [vmem:[%s442 + $0x58] sm:$0xf]
                  %467 = vst [vmem:[%s443 + $0x2c] sm:$0xf] %v466
                  %v468 = vld [vmem:[%s442 + $0x60] sm:$0xf]
                  %469 = vst [vmem:[%s443 + $0x30] sm:$0xf] %v468
                  %v470 = vld [vmem:[%s442 + $0x68] sm:$0xf]
                  %471 = vst [vmem:[%s443 + $0x34] sm:$0xf] %v470
                  %v472 = vld [vmem:[%s442 + $0x70] sm:$0xf]
                  %473 = vst [vmem:[%s443 + $0x38] sm:$0xf] %v472
                  %v474 = vld [vmem:[%s442 + $0x78] sm:$0xf]
                  %475 = vst [vmem:[%s443 + $0x3c] sm:$0xf] %v474
                  %v476 = vld [vmem:[%s442 + $0x80] sm:$0xf]
                  %477 = vst [vmem:[%s443 + $0x40] sm:$0xf] %v476
                  %v478 = vld [vmem:[%s442 + $0x88] sm:$0xf]
                  %479 = vst [vmem:[%s443 + $0x44] sm:$0xf] %v478
                  %v480 = vld [vmem:[%s442 + $0x90] sm:$0xf]
                  %481 = vst [vmem:[%s443 + $0x48] sm:$0xf] %v480
                  %v482 = vld [vmem:[%s442 + $0x98] sm:$0xf]
                  %483 = vst [vmem:[%s443 + $0x4c] sm:$0xf] %v482
                  %v484 = vld [vmem:[%s442 + $0xa0] sm:$0xf]
                  %485 = vst [vmem:[%s443 + $0x50] sm:$0xf] %v484
                  %v486 = vld [vmem:[%s442 + $0xa8] sm:$0xf]
                  %487 = vst [vmem:[%s443 + $0x54] sm:$0xf] %v486
                  %v488 = vld [vmem:[%s442 + $0xb0] sm:$0xf]
                  %489 = vst [vmem:[%s443 + $0x58] sm:$0xf] %v488
                  %v490 = vld [vmem:[%s442 + $0xb8] sm:$0xf]
                  %491 = vst [vmem:[%s443 + $0x5c] sm:$0xf] %v490
                  %v492 = vld [vmem:[%s442 + $0xc0] sm:$0xf]
                  %493 = vst [vmem:[%s443 + $0x60] sm:$0xf] %v492
                  %v494 = vld [vmem:[%s442 + $0xc8] sm:$0xf]
                  %495 = vst [vmem:[%s443 + $0x64] sm:$0xf] %v494
                  %v496 = vld [vmem:[%s442 + $0xd0] sm:$0xf]
                  %497 = vst [vmem:[%s443 + $0x68] sm:$0xf] %v496
                  %v498 = vld [vmem:[%s442 + $0xd8] sm:$0xf]
                  %499 = vst [vmem:[%s443 + $0x6c] sm:$0xf] %v498
                $region104: #{encoder_forward.1} parent=91 // loop_footer
                  %s441 = sadd.s32 1, %s437
                $region105: #{encoder_forward.1} parent=91 // loop_footer_branch
                  %436 = sbr.rel target = $region101
                $region106: #{encoder_forward.1} parent=91 // loop_exit
                  _
              $region92: #{encoder_forward.1} parent=76 // pred_fallthru
                _
            $region77: #{encoder_forward.1} parent=72 // pred_fallthru
              _
            // Predicated region
            $region78: #{encoder_forward.1} parent=72 // pred_check
              _
            $region79: #{encoder_forward.1} parent=72 // pred_check_branch
              %359 = sbr.rel (0) target = $region81
            $region80: #{encoder_forward.1} parent=72 // pred_region
              loop: start=0, step=1, limit=1
              $region82: #{encoder_forward.1} parent=80 // loop_pre_header
                _
              $region83: #{encoder_forward.1} parent=80 // loop_header
                %s362 = sphi 0, %s366
                %p363 = scmp.ge.s32.totalorder %s362, 1
                %s367 = sphi %s353, %s353
                %s368 = sphi %s346, %s346
              $region84: #{encoder_forward.1} parent=80 // loop_header_branch
                %365 = sbr.rel (%p363) target = $region88
              $region85: #{encoder_forward.1} parent=80 // loop_body
                %v369 = vld [vmem:[%s367] sm:$0xf]
                %370 = vst [vmem:[%s368] sm:$0xf] %v369
                %v371 = vld [vmem:[%s367 + $0x8] sm:$0xf]
                %372 = vst [vmem:[%s368 + $0x4] sm:$0xf] %v371
                %v373 = vld [vmem:[%s367 + $0x10] sm:$0xf]
                %374 = vst [vmem:[%s368 + $0x8] sm:$0xf] %v373
                %v375 = vld [vmem:[%s367 + $0x18] sm:$0xf]
                %376 = vst [vmem:[%s368 + $0xc] sm:$0xf] %v375
                %v377 = vld [vmem:[%s367 + $0x20] sm:$0xf]
                %378 = vst [vmem:[%s368 + $0x10] sm:$0xf] %v377
                %v379 = vld [vmem:[%s367 + $0x28] sm:$0xf]
                %380 = vst [vmem:[%s368 + $0x14] sm:$0xf] %v379
                %v381 = vld [vmem:[%s367 + $0x30] sm:$0xf]
                %382 = vst [vmem:[%s368 + $0x18] sm:$0xf] %v381
                %v383 = vld [vmem:[%s367 + $0x38] sm:$0xf]
                %384 = vst [vmem:[%s368 + $0x1c] sm:$0xf] %v383
                %v385 = vld [vmem:[%s367 + $0x40] sm:$0xf]
                %386 = vst [vmem:[%s368 + $0x20] sm:$0xf] %v385
                %v387 = vld [vmem:[%s367 + $0x48] sm:$0xf]
                %388 = vst [vmem:[%s368 + $0x24] sm:$0xf] %v387
                %v389 = vld [vmem:[%s367 + $0x50] sm:$0xf]
                %390 = vst [vmem:[%s368 + $0x28] sm:$0xf] %v389
                %v391 = vld [vmem:[%s367 + $0x58] sm:$0xf]
                %392 = vst [vmem:[%s368 + $0x2c] sm:$0xf] %v391
                %v393 = vld [vmem:[%s367 + $0x60] sm:$0xf]
                %394 = vst [vmem:[%s368 + $0x30] sm:$0xf] %v393
                %v395 = vld [vmem:[%s367 + $0x68] sm:$0xf]
                %396 = vst [vmem:[%s368 + $0x34] sm:$0xf] %v395
                %v397 = vld [vmem:[%s367 + $0x70] sm:$0xf]
                %398 = vst [vmem:[%s368 + $0x38] sm:$0xf] %v397
                %v399 = vld [vmem:[%s367 + $0x78] sm:$0xf]
                %400 = vst [vmem:[%s368 + $0x3c] sm:$0xf] %v399
                %v401 = vld [vmem:[%s367 + $0x80] sm:$0xf]
                %402 = vst [vmem:[%s368 + $0x40] sm:$0xf] %v401
                %v403 = vld [vmem:[%s367 + $0x88] sm:$0xf]
                %404 = vst [vmem:[%s368 + $0x44] sm:$0xf] %v403
                %v405 = vld [vmem:[%s367 + $0x90] sm:$0xf]
                %406 = vst [vmem:[%s368 + $0x48] sm:$0xf] %v405
                %v407 = vld [vmem:[%s367 + $0x98] sm:$0xf]
                %408 = vst [vmem:[%s368 + $0x4c] sm:$0xf] %v407
                %v409 = vld [vmem:[%s367 + $0xa0] sm:$0xf]
                %410 = vst [vmem:[%s368 + $0x50] sm:$0xf] %v409
                %v411 = vld [vmem:[%s367 + $0xa8] sm:$0xf]
                %412 = vst [vmem:[%s368 + $0x54] sm:$0xf] %v411
                %v413 = vld [vmem:[%s367 + $0xb0] sm:$0xf]
                %414 = vst [vmem:[%s368 + $0x58] sm:$0xf] %v413
                %v415 = vld [vmem:[%s367 + $0xb8] sm:$0xf]
                %416 = vst [vmem:[%s368 + $0x5c] sm:$0xf] %v415
                %v417 = vld [vmem:[%s367 + $0xc0] sm:$0xf]
                %418 = vst [vmem:[%s368 + $0x60] sm:$0xf] %v417
                %v419 = vld [vmem:[%s367 + $0xc8] sm:$0xf]
                %420 = vst [vmem:[%s368 + $0x64] sm:$0xf] %v419
                %v421 = vld [vmem:[%s367 + $0xd0] sm:$0xf]
                %422 = vst [vmem:[%s368 + $0x68] sm:$0xf] %v421
                %v423 = vld [vmem:[%s367 + $0xd8] sm:$0xf]
                %424 = vst [vmem:[%s368 + $0x6c] sm:$0xf] %v423
              $region86: #{encoder_forward.1} parent=80 // loop_footer
                %s366 = sadd.s32 1, %s362
              $region87: #{encoder_forward.1} parent=80 // loop_footer_branch
                %361 = sbr.rel target = $region83
              $region88: #{encoder_forward.1} parent=80 // loop_exit
                _
            $region81: #{encoder_forward.1} parent=72 // pred_fallthru
              _
          $region73: #{encoder_forward.1} parent=68 // pred_fallthru
            _
          %500 = vnop
        $region69: #{encoder_forward.1} parent=23 // pred_fallthru
          _
      $region24: #{encoder_forward.1} parent=5 // pred_fallthru
        _
      %p501 = scmp.le.s32.totalorder 1, %s13
      %p502 = scmp.lt.s32.totalorder %s13, 3
      %p503 = pnand %p501, %p502
      %p504 = pneg %p503
      // Predicated region
      $region107: #{encoder_forward.1} parent=5 // pred_check
        _
      $region108: #{encoder_forward.1} parent=5 // pred_check_branch
        %506 = sbr.rel (%p503) target = $region110
      $region109: #{encoder_forward.1} parent=5 // pred_region
        %s507 = ssub.s32 %s13, 1
        %s508 = sand.u32 %s40, 1
        %s509 = sand.u32 %s40, 1
        %s510 = smul.addr %s509, 112
        %s511 = scalar_lea.vmem [#allocation2], %s510
        // Predicated region
        $region111: #{encoder_forward.1} parent=109 // pred_check
          %p512 = pneg %p53
        $region112: #{encoder_forward.1} parent=109 // pred_check_branch
          %514 = sbr.rel (%p512) target = $region114
        $region113: #{encoder_forward.1} parent=109 // pred_region
          _
        $region114: #{encoder_forward.1} parent=109 // pred_fallthru
          _
        %s515 = sand.u32 %s74, 1
        %s516 = sand.u32 %s74, 1
        %s517 = smul.addr %s516, 112
        %s518 = scalar_lea.vmem [#allocation3], %s517
        // Predicated region
        $region115: #{encoder_forward.1} parent=109 // pred_check
          %p519 = pneg %p87
        $region116: #{encoder_forward.1} parent=109 // pred_check_branch
          %521 = sbr.rel (%p519) target = $region118
        $region117: #{encoder_forward.1} parent=109 // pred_region
          _
        $region118: #{encoder_forward.1} parent=109 // pred_fallthru
          _
        %s522 = sand.u32 %s40, 1
        %s523 = sand.u32 %s40, 1
        %s524 = smul.addr %s523, 112
        %s525 = scalar_lea.vmem [#allocation2], %s524
        %p526 = pneg %p53
        %p527 = pneg %p50
        %s528 = sand.u32 %s74, 1
        %s529 = sand.u32 %s74, 1
        %s530 = smul.addr %s529, 112
        %s531 = scalar_lea.vmem [#allocation3], %s530
        %p532 = pneg %p87
        %p533 = pneg %p84
        %p534 = pneg %p108
        %p535 = pneg %p105
        %p536 = pneg %p129
        %p537 = pneg %p126
        %p538 = pneg %p157
        %p539 = pneg %p154
        %s540 = sand.u32 %s144, 1
        %s541 = scalar_lea.sflag [#allocation5], %s540
        %s542 = sand.u32 %s144, 1
        %s543 = smul.addr %s542, 256
        %s544 = scalar_lea.vmem [#allocation4], %s543
        %s545 = sadd.s32 %s23, 1
        %p546 = scmp.lt.s32.totalorder %s545, 1
        %s547 = scalar_select %p546, %s545, 1
        %v549 = vld [vmem:[%s511] sm:$0xf]
        %v550 = vld [vmem:[%s511 + $0x4] sm:$0xf]
        %v551 = vld [vmem:[%s511 + $0x8] sm:$0xf]
        %v552 = vld [vmem:[%s511 + $0xc] sm:$0xf]
        %v553 = vld [vmem:[%s511 + $0x10] sm:$0xf]
        %v554 = vld [vmem:[%s511 + $0x14] sm:$0xf]
        %v555 = vld [vmem:[%s511 + $0x18] sm:$0xf]
        %v556 = vld [vmem:[%s511 + $0x1c] sm:$0xf]
        %v557 = vld [vmem:[%s511 + $0x20] sm:$0xf]
        %v558 = vld [vmem:[%s511 + $0x24] sm:$0xf]
        %v559 = vld [vmem:[%s511 + $0x28] sm:$0xf]
        %v560 = vld [vmem:[%s511 + $0x2c] sm:$0xf]
        %v561 = vld [vmem:[%s511 + $0x30] sm:$0xf]
        %v562 = vld [vmem:[%s511 + $0x34] sm:$0xf]
        %v563 = vld [vmem:[%s511 + $0x38] sm:$0xf]
        %v564 = vld [vmem:[%s511 + $0x3c] sm:$0xf]
        %v565 = vld [vmem:[%s511 + $0x40] sm:$0xf]
        %v566 = vld [vmem:[%s511 + $0x44] sm:$0xf]
        %v567 = vld [vmem:[%s511 + $0x48] sm:$0xf]
        %v568 = vld [vmem:[%s511 + $0x4c] sm:$0xf]
        %v569 = vld [vmem:[%s511 + $0x50] sm:$0xf]
        %v570 = vld [vmem:[%s511 + $0x54] sm:$0xf]
        %v571 = vld [vmem:[%s511 + $0x58] sm:$0xf]
        %v572 = vld [vmem:[%s511 + $0x5c] sm:$0xf]
        %v573 = vld [vmem:[%s511 + $0x60] sm:$0xf]
        %v574 = vld [vmem:[%s511 + $0x64] sm:$0xf]
        %v575 = vld [vmem:[%s511 + $0x68] sm:$0xf]
        %v576 = vld [vmem:[%s511 + $0x6c] sm:$0xf]
        %v577 = vld [vmem:[%s2] sm:$0xff]
        %v578 = vld [vmem:[%s2 + $0x8] sm:$0xff]
        %v579 = vld [vmem:[%s2 + $0x10] sm:$0xff]
        %v580 = vld [vmem:[%s2 + $0x18] sm:$0xff]
        %v581 = vld [vmem:[%s2 + $0x20] sm:$0xff]
        %v582 = vld [vmem:[%s2 + $0x28] sm:$0xff]
        %v583 = vld [vmem:[%s2 + $0x30] sm:$0xff]
        %v584 = vld [vmem:[%s2 + $0x38] sm:$0xff]
        %v585 = vld [vmem:[%s2 + $0x40] sm:$0xff]
        %v586 = vld [vmem:[%s2 + $0x48] sm:$0xff]
        %v587 = vld [vmem:[%s2 + $0x50] sm:$0xff]
        %v588 = vld [vmem:[%s2 + $0x58] sm:$0xff]
        %v589 = vld [vmem:[%s2 + $0x60] sm:$0xff]
        %v590 = vld [vmem:[%s2 + $0x68] sm:$0xff]
        %v591 = vld [vmem:[%s2 + $0x70] sm:$0xff]
        %v592 = vld [vmem:[%s2 + $0x78] sm:$0xff]
        %v593 = vld [vmem:[%s2 + $0x80] sm:$0xff]
        %v594 = vld [vmem:[%s2 + $0x88] sm:$0xff]
        %v595 = vld [vmem:[%s2 + $0x90] sm:$0xff]
        %v596 = vld [vmem:[%s2 + $0x98] sm:$0xff]
        %v597 = vld [vmem:[%s2 + $0xa0] sm:$0xff]
        %v598 = vld [vmem:[%s2 + $0xa8] sm:$0xff]
        %v599 = vld [vmem:[%s2 + $0xb0] sm:$0xff]
        %v600 = vld [vmem:[%s2 + $0xb8] sm:$0xff]
        %v601 = vld [vmem:[%s2 + $0xc0] sm:$0xff]
        %v602 = vld [vmem:[%s2 + $0xc8] sm:$0xff]
        %v603 = vld [vmem:[%s2 + $0xd0] sm:$0xff]
        %v604 = vld [vmem:[%s2 + $0xd8] sm:$0xff]
        %v605 = vld [vmem:[%s2 + $0xe0] sm:$0xff]
        %v606 = vld [vmem:[%s2 + $0xe8] sm:$0xff]
        %v607 = vld [vmem:[%s2 + $0xf0] sm:$0xff]
        %v608 = vld [vmem:[%s2 + $0xf8] sm:$0xff]
        %v609 = vld [vmem:[%s518] sm:$0xf]
        %v610 = vld [vmem:[%s518 + $0x4] sm:$0xf]
        %v611 = vld [vmem:[%s518 + $0x8] sm:$0xf]
        %v612 = vld [vmem:[%s518 + $0xc] sm:$0xf]
        %v613 = vld [vmem:[%s518 + $0x10] sm:$0xf]
        %v614 = vld [vmem:[%s518 + $0x14] sm:$0xf]
        %v615 = vld [vmem:[%s518 + $0x18] sm:$0xf]
        %v616 = vld [vmem:[%s518 + $0x1c] sm:$0xf]
        %v617 = vld [vmem:[%s518 + $0x20] sm:$0xf]
        %v618 = vld [vmem:[%s518 + $0x24] sm:$0xf]
        %v619 = vld [vmem:[%s518 + $0x28] sm:$0xf]
        %v620 = vld [vmem:[%s518 + $0x2c] sm:$0xf]
        %v621 = vld [vmem:[%s518 + $0x30] sm:$0xf]
        %v622 = vld [vmem:[%s518 + $0x34] sm:$0xf]
        %v623 = vld [vmem:[%s518 + $0x38] sm:$0xf]
        %v624 = vld [vmem:[%s518 + $0x3c] sm:$0xf]
        %v625 = vld [vmem:[%s518 + $0x40] sm:$0xf]
        %v626 = vld [vmem:[%s518 + $0x44] sm:$0xf]
        %v627 = vld [vmem:[%s518 + $0x48] sm:$0xf]
        %v628 = vld [vmem:[%s518 + $0x4c] sm:$0xf]
        %v629 = vld [vmem:[%s518 + $0x50] sm:$0xf]
        %v630 = vld [vmem:[%s518 + $0x54] sm:$0xf]
        %v631 = vld [vmem:[%s518 + $0x58] sm:$0xf]
        %v632 = vld [vmem:[%s518 + $0x5c] sm:$0xf]
        %v633 = vld [vmem:[%s518 + $0x60] sm:$0xf]
        %v634 = vld [vmem:[%s518 + $0x64] sm:$0xf]
        %v635 = vld [vmem:[%s518 + $0x68] sm:$0xf]
        %v636 = vld [vmem:[%s518 + $0x6c] sm:$0xf]
        %v665 = vunpack.c.l.b16 %v549
        %v666 = vunpack.c.l.b16 %v550
        %v667 = vunpack.c.l.b16 %v551
        %v668 = vunpack.c.l.b16 %v552
        %v669 = vunpack.c.l.b16 %v553
        %v670 = vunpack.c.l.b16 %v554
        %v671 = vunpack.c.l.b16 %v555
        %v672 = vunpack.c.l.b16 %v556
        %v673 = vunpack.c.l.b16 %v557
        %v674 = vunpack.c.l.b16 %v558
        %v675 = vunpack.c.l.b16 %v559
        %v676 = vunpack.c.l.b16 %v560
        %v677 = vunpack.c.l.b16 %v561
        %v678 = vunpack.c.l.b16 %v562
        %v679 = vunpack.c.l.b16 %v563
        %v680 = vunpack.c.l.b16 %v564
        %v681 = vunpack.c.l.b16 %v565
        %v682 = vunpack.c.l.b16 %v566
        %v683 = vunpack.c.l.b16 %v567
        %v684 = vunpack.c.l.b16 %v568
        %v685 = vunpack.c.l.b16 %v569
        %v686 = vunpack.c.l.b16 %v570
        %v687 = vunpack.c.l.b16 %v571
        %v688 = vunpack.c.l.b16 %v572
        %v689 = vunpack.c.l.b16 %v573
        %v690 = vunpack.c.l.b16 %v574
        %v691 = vunpack.c.l.b16 %v575
        %v692 = vunpack.c.l.b16 %v576
        %v693 = vpack.c.b16 %v666, %v665
        %v694 = vpack.c.b16 %v668, %v667
        %v695 = vpack.c.b16 %v670, %v669
        %v696 = vpack.c.b16 %v672, %v671
        %v697 = vpack.c.b16 %v674, %v673
        %v698 = vpack.c.b16 %v676, %v675
        %v699 = vpack.c.b16 %v678, %v677
        %v700 = vpack.c.b16 %v680, %v679
        %v701 = vpack.c.b16 %v682, %v681
        %v702 = vpack.c.b16 %v684, %v683
        %v703 = vpack.c.b16 %v686, %v685
        %v704 = vpack.c.b16 %v688, %v687
        %v705 = vpack.c.b16 %v690, %v689
        %v706 = vpack.c.b16 %v692, %v691
        %707 = vrot.lane.b32.xlu0 %v693, 127
        %v708 = vpop.permute.xlu0 %707
        %709 = vrot.lane.b32.xlu0 %v694, 127
        %v710 = vpop.permute.xlu0 %709
        %711 = vrot.lane.b32.xlu0 %v695, 127
        %v712 = vpop.permute.xlu0 %711
        %713 = vrot.lane.b32.xlu0 %v696, 127
        %v714 = vpop.permute.xlu0 %713
        %715 = vrot.lane.b32.xlu0 %v697, 127
        %v716 = vpop.permute.xlu0 %715
        %717 = vrot.lane.b32.xlu0 %v698, 127
        %v718 = vpop.permute.xlu0 %717
        %719 = vrot.lane.b32.xlu0 %v699, 127
        %v720 = vpop.permute.xlu0 %719
        %721 = vrot.lane.b32.xlu0 %v700, 127
        %v722 = vpop.permute.xlu0 %721
        %723 = vrot.lane.b32.xlu0 %v701, 127
        %v724 = vpop.permute.xlu0 %723
        %725 = vrot.lane.b32.xlu0 %v702, 127
        %v726 = vpop.permute.xlu0 %725
        %727 = vrot.lane.b32.xlu0 %v703, 127
        %v728 = vpop.permute.xlu0 %727
        %729 = vrot.lane.b32.xlu0 %v704, 127
        %v730 = vpop.permute.xlu0 %729
        %731 = vrot.lane.b32.xlu0 %v705, 127
        %v732 = vpop.permute.xlu0 %731
        %733 = vrot.lane.b32.xlu0 %v706, 127
        %v734 = vpop.permute.xlu0 %733
        %v763 = vunpack.c.l.b16 %v609
        %v764 = vunpack.c.l.b16 %v610
        %v765 = vunpack.c.l.b16 %v611
        %v766 = vunpack.c.l.b16 %v612
        %v767 = vunpack.c.l.b16 %v613
        %v768 = vunpack.c.l.b16 %v614
        %v769 = vunpack.c.l.b16 %v615
        %v770 = vunpack.c.l.b16 %v616
        %v771 = vunpack.c.l.b16 %v617
        %v772 = vunpack.c.l.b16 %v618
        %v773 = vunpack.c.l.b16 %v619
        %v774 = vunpack.c.l.b16 %v620
        %v775 = vunpack.c.l.b16 %v621
        %v776 = vunpack.c.l.b16 %v622
        %v777 = vunpack.c.l.b16 %v623
        %v778 = vunpack.c.l.b16 %v624
        %v779 = vunpack.c.l.b16 %v625
        %v780 = vunpack.c.l.b16 %v626
        %v781 = vunpack.c.l.b16 %v627
        %v782 = vunpack.c.l.b16 %v628
        %v783 = vunpack.c.l.b16 %v629
        %v784 = vunpack.c.l.b16 %v630
        %v785 = vunpack.c.l.b16 %v631
        %v786 = vunpack.c.l.b16 %v632
        %v787 = vunpack.c.l.b16 %v633
        %v788 = vunpack.c.l.b16 %v634
        %v789 = vunpack.c.l.b16 %v635
        %v790 = vunpack.c.l.b16 %v636
        %v791 = vpack.c.b16 %v764, %v763
        %v792 = vpack.c.b16 %v766, %v765
        %v793 = vpack.c.b16 %v768, %v767
        %v794 = vpack.c.b16 %v770, %v769
        %v795 = vpack.c.b16 %v772, %v771
        %v796 = vpack.c.b16 %v774, %v773
        %v797 = vpack.c.b16 %v776, %v775
        %v798 = vpack.c.b16 %v778, %v777
        %v799 = vpack.c.b16 %v780, %v779
        %v800 = vpack.c.b16 %v782, %v781
        %v801 = vpack.c.b16 %v784, %v783
        %v802 = vpack.c.b16 %v786, %v785
        %v803 = vpack.c.b16 %v788, %v787
        %v804 = vpack.c.b16 %v790, %v789
        %805 = vrot.lane.b32.xlu0 %v791, 127
        %v806 = vpop.permute.xlu0 %805
        %807 = vrot.lane.b32.xlu0 %v792, 127
        %v808 = vpop.permute.xlu0 %807
        %809 = vrot.lane.b32.xlu0 %v793, 127
        %v810 = vpop.permute.xlu0 %809
        %811 = vrot.lane.b32.xlu0 %v794, 127
        %v812 = vpop.permute.xlu0 %811
        %813 = vrot.lane.b32.xlu0 %v795, 127
        %v814 = vpop.permute.xlu0 %813
        %815 = vrot.lane.b32.xlu0 %v796, 127
        %v816 = vpop.permute.xlu0 %815
        %817 = vrot.lane.b32.xlu0 %v797, 127
        %v818 = vpop.permute.xlu0 %817
        %819 = vrot.lane.b32.xlu0 %v798, 127
        %v820 = vpop.permute.xlu0 %819
        %821 = vrot.lane.b32.xlu0 %v799, 127
        %v822 = vpop.permute.xlu0 %821
        %823 = vrot.lane.b32.xlu0 %v800, 127
        %v824 = vpop.permute.xlu0 %823
        %825 = vrot.lane.b32.xlu0 %v801, 127
        %v826 = vpop.permute.xlu0 %825
        %827 = vrot.lane.b32.xlu0 %v802, 127
        %v828 = vpop.permute.xlu0 %827
        %829 = vrot.lane.b32.xlu0 %v803, 127
        %v830 = vpop.permute.xlu0 %829
        %831 = vrot.lane.b32.xlu0 %v804, 127
        %v832 = vpop.permute.xlu0 %831
        %vm833 = vcmask 1039360
        %v836 = vsel %vm833, %v708, %v806
        %v840 = vsel %vm833, %v710, %v808
        %v844 = vsel %vm833, %v712, %v810
        %v848 = vsel %vm833, %v714, %v812
        %v852 = vsel %vm833, %v716, %v814
        %v856 = vsel %vm833, %v718, %v816
        %v860 = vsel %vm833, %v720, %v818
        %v864 = vsel %vm833, %v722, %v820
        %v868 = vsel %vm833, %v724, %v822
        %v872 = vsel %vm833, %v726, %v824
        %v876 = vsel %vm833, %v728, %v826
        %v880 = vsel %vm833, %v730, %v828
        %v884 = vsel %vm833, %v732, %v830
        %v888 = vsel %vm833, %v734, %v832
        %v890 = vld [vmem:[%s3] sm:$0xff]
        %v891 = vld [vmem:[%s3 + $0x8] sm:$0xff]
        %v892 = vld [vmem:[%s3 + $0x10] sm:$0xff]
        %v893 = vld [vmem:[%s3 + $0x18] sm:$0xff]
        %v894 = vld [vmem:[%s3 + $0x20] sm:$0xff]
        %v895 = vld [vmem:[%s3 + $0x28] sm:$0xff]
        %v896 = vld [vmem:[%s3 + $0x30] sm:$0xff]
        %v897 = vld [vmem:[%s3 + $0x38] sm:$0xff]
        %v898 = vld [vmem:[%s3 + $0x40] sm:$0xff]
        %v899 = vld [vmem:[%s3 + $0x48] sm:$0xff]
        %v900 = vld [vmem:[%s3 + $0x50] sm:$0xff]
        %v901 = vld [vmem:[%s3 + $0x58] sm:$0xff]
        %v902 = vld [vmem:[%s3 + $0x60] sm:$0xff]
        %v903 = vld [vmem:[%s3 + $0x68] sm:$0xff]
        %v904 = vld [vmem:[%s3 + $0x70] sm:$0xff]
        %v905 = vld [vmem:[%s3 + $0x78] sm:$0xff]
        %v906 = vld [vmem:[%s3 + $0x80] sm:$0xff]
        %v907 = vld [vmem:[%s3 + $0x88] sm:$0xff]
        %v908 = vld [vmem:[%s3 + $0x90] sm:$0xff]
        %v909 = vld [vmem:[%s3 + $0x98] sm:$0xff]
        %v910 = vld [vmem:[%s3 + $0xa0] sm:$0xff]
        %v911 = vld [vmem:[%s3 + $0xa8] sm:$0xff]
        %v912 = vld [vmem:[%s3 + $0xb0] sm:$0xff]
        %v913 = vld [vmem:[%s3 + $0xb8] sm:$0xff]
        %v914 = vld [vmem:[%s3 + $0xc0] sm:$0xff]
        %v915 = vld [vmem:[%s3 + $0xc8] sm:$0xff]
        %v916 = vld [vmem:[%s3 + $0xd0] sm:$0xff]
        %v917 = vld [vmem:[%s3 + $0xd8] sm:$0xff]
        %v918 = vld [vmem:[%s3 + $0xe0] sm:$0xff]
        %v919 = vld [vmem:[%s3 + $0xe8] sm:$0xff]
        %v920 = vld [vmem:[%s3 + $0xf0] sm:$0xff]
        %v921 = vld [vmem:[%s3 + $0xf8] sm:$0xff]
        %v954 = vunpack.c.l.b16 %v890
        %v955 = vunpack.c.h.b16 %v890
        %v956 = vunpack.c.l.b16 %v891
        %v957 = vunpack.c.h.b16 %v891
        %v958 = vunpack.c.l.b16 %v892
        %v959 = vunpack.c.h.b16 %v892
        %v960 = vunpack.c.l.b16 %v893
        %v961 = vunpack.c.h.b16 %v893
        %v962 = vunpack.c.l.b16 %v894
        %v963 = vunpack.c.h.b16 %v894
        %v964 = vunpack.c.l.b16 %v895
        %v965 = vunpack.c.h.b16 %v895
        %v966 = vunpack.c.l.b16 %v896
        %v967 = vunpack.c.h.b16 %v896
        %v968 = vunpack.c.l.b16 %v897
        %v969 = vunpack.c.h.b16 %v897
        %v970 = vunpack.c.l.b16 %v898
        %v971 = vunpack.c.h.b16 %v898
        %v972 = vunpack.c.l.b16 %v899
        %v973 = vunpack.c.h.b16 %v899
        %v974 = vunpack.c.l.b16 %v900
        %v975 = vunpack.c.h.b16 %v900
        %v976 = vunpack.c.l.b16 %v901
        %v977 = vunpack.c.h.b16 %v901
        %v978 = vunpack.c.l.b16 %v902
        %v979 = vunpack.c.h.b16 %v902
        %v980 = vunpack.c.l.b16 %v903
        %v981 = vunpack.c.h.b16 %v903
        %v982 = vunpack.c.l.b16 %v904
        %v983 = vunpack.c.h.b16 %v904
        %v984 = vunpack.c.l.b16 %v905
        %v985 = vunpack.c.h.b16 %v905
        %v986 = vunpack.c.l.b16 %v906
        %v987 = vunpack.c.h.b16 %v906
        %v988 = vunpack.c.l.b16 %v907
        %v989 = vunpack.c.h.b16 %v907
        %v990 = vunpack.c.l.b16 %v908
        %v991 = vunpack.c.h.b16 %v908
        %v992 = vunpack.c.l.b16 %v909
        %v993 = vunpack.c.h.b16 %v909
        %v994 = vunpack.c.l.b16 %v910
        %v995 = vunpack.c.h.b16 %v910
        %v996 = vunpack.c.l.b16 %v911
        %v997 = vunpack.c.h.b16 %v911
        %v998 = vunpack.c.l.b16 %v912
        %v999 = vunpack.c.h.b16 %v912
        %v1000 = vunpack.c.l.b16 %v913
        %v1001 = vunpack.c.h.b16 %v913
        %v1002 = vunpack.c.l.b16 %v914
        %v1003 = vunpack.c.h.b16 %v914
        %v1004 = vunpack.c.l.b16 %v915
        %v1005 = vunpack.c.h.b16 %v915
        %v1006 = vunpack.c.l.b16 %v916
        %v1007 = vunpack.c.h.b16 %v916
        %v1008 = vunpack.c.l.b16 %v917
        %v1009 = vunpack.c.h.b16 %v917
        %v1010 = vunpack.c.l.b16 %v918
        %v1011 = vunpack.c.h.b16 %v918
        %v1012 = vunpack.c.l.b16 %v919
        %v1013 = vunpack.c.h.b16 %v919
        %v1014 = vunpack.c.l.b16 %v920
        %v1015 = vunpack.c.h.b16 %v920
        %v1016 = vunpack.c.l.b16 %v921
        %v1017 = vunpack.c.h.b16 %v921
        %v1018 = vpack.c.b16 %v956, %v954
        %v1019 = vpack.c.b16 %v957, %v955
        %v1020 = vpack.c.b16 %v960, %v958
        %v1021 = vpack.c.b16 %v961, %v959
        %v1022 = vpack.c.b16 %v964, %v962
        %v1023 = vpack.c.b16 %v965, %v963
        %v1024 = vpack.c.b16 %v968, %v966
        %v1025 = vpack.c.b16 %v969, %v967
        %v1026 = vpack.c.b16 %v972, %v970
        %v1027 = vpack.c.b16 %v973, %v971
        %v1028 = vpack.c.b16 %v976, %v974
        %v1029 = vpack.c.b16 %v977, %v975
        %v1030 = vpack.c.b16 %v980, %v978
        %v1031 = vpack.c.b16 %v981, %v979
        %v1032 = vpack.c.b16 %v984, %v982
        %v1033 = vpack.c.b16 %v985, %v983
        %v1034 = vpack.c.b16 %v988, %v986
        %v1035 = vpack.c.b16 %v989, %v987
        %v1036 = vpack.c.b16 %v992, %v990
        %v1037 = vpack.c.b16 %v993, %v991
        %v1038 = vpack.c.b16 %v996, %v994
        %v1039 = vpack.c.b16 %v997, %v995
        %v1040 = vpack.c.b16 %v1000, %v998
        %v1041 = vpack.c.b16 %v1001, %v999
        %v1042 = vpack.c.b16 %v1004, %v1002
        %v1043 = vpack.c.b16 %v1005, %v1003
        %v1044 = vpack.c.b16 %v1008, %v1006
        %v1045 = vpack.c.b16 %v1009, %v1007
        %v1046 = vpack.c.b16 %v1012, %v1010
        %v1047 = vpack.c.b16 %v1013, %v1011
        %v1048 = vpack.c.b16 %v1016, %v1014
        %v1049 = vpack.c.b16 %v1017, %v1015
        %vm1066 = vcmask 785408
        %v1068 = vsel %vm1066, %v1019, 0
        %v1071 = vsel %vm1066, %v1021, 0
        %v1074 = vsel %vm1066, %v1023, 0
        %v1077 = vsel %vm1066, %v1025, 0
        %v1080 = vsel %vm1066, %v1027, 0
        %v1083 = vsel %vm1066, %v1029, 0
        %v1086 = vsel %vm1066, %v1031, 0
        %v1089 = vsel %vm1066, %v1033, 0
        %v1092 = vsel %vm1066, %v1035, 0
        %v1095 = vsel %vm1066, %v1037, 0
        %v1098 = vsel %vm1066, %v1039, 0
        %v1101 = vsel %vm1066, %v1041, 0
        %v1104 = vsel %vm1066, %v1043, 0
        %v1107 = vsel %vm1066, %v1045, 0
        %v1110 = vsel %vm1066, %v1047, 0
        %v1113 = vsel %vm1066, %v1049, 0
        %1115 = vmatprep.subr.bf16.mxu0 0
        %1116 = vmatpush1.bf16.msra.mxu0 %v836
        %1117 = vmatprep.subr.bf16.mxu0 0
        %1118 = vmatpush1.bf16.msra.mxu0 %v840
        %1119 = vmatprep.subr.bf16.mxu0 0
        %1120 = vmatpush1.bf16.msra.mxu0 %v844
        %1121 = vmatprep.subr.bf16.mxu0 0
        %1122 = vmatpush1.bf16.msra.mxu0 %v848
        %1123 = vmatprep.subr.bf16.mxu0 0
        %1124 = vmatpush1.bf16.msra.mxu0 %v852
        %1125 = vmatprep.subr.bf16.mxu0 0
        %1126 = vmatpush1.bf16.msra.mxu0 %v856
        %1127 = vmatprep.subr.bf16.mxu0 0
        %1128 = vmatpush1.bf16.msra.mxu0 %v860
        %1129 = vmatprep.subr.bf16.mxu0 0
        %1130 = vmatpush1.bf16.msra.mxu0 %v864
        %1131 = vmatprep.subr.bf16.mxu0 0
        %1132 = vmatpush1.bf16.msra.mxu0 %v868
        %1133 = vmatprep.subr.bf16.mxu0 0
        %1134 = vmatpush1.bf16.msra.mxu0 %v872
        %1135 = vmatprep.subr.bf16.mxu0 0
        %1136 = vmatpush1.bf16.msra.mxu0 %v876
        %1137 = vmatprep.subr.bf16.mxu0 0
        %1138 = vmatpush1.bf16.msra.mxu0 %v880
        %1139 = vmatprep.subr.bf16.mxu0 0
        %1140 = vmatpush1.bf16.msra.mxu0 %v884
        %1141 = vmatprep.subr.bf16.mxu0 0
        %1142 = vmatpush1.bf16.msra.mxu0 %v888
        %1143 = vmatprep.subr.bf16.mxu0 0
        %1144 = vmatpush1.bf16.msra.mxu0 0
        %1145 = vmatprep.subr.bf16.mxu0 0
        %1146 = vmatpush1.bf16.msra.mxu0 0
        %1147 = vmatprep.mubr.bf16.mxu0 %v1068
        %1148 = vmatmul.mubr.bf16.gmra.mrb[0].mxu0 %v1018
        %v1149 = vpop.f32.mrb[0].mxu0
        %v1150 = vadd.f32 0.0, %v1149
        %v1151 = vpop.f32.mrb[0].mxu0
        %v1152 = vpop.f32.mrb[0].mxu0
        %v1153 = vadd.f32 0.0, %v1152
        %v1154 = vpop.f32.mrb[0].mxu0
        %1155 = vmatprep.mubr.bf16.mxu0 %v1071
        %1156 = vmatmul.mubr.bf16.gmra.mrb[0].mxu0 %v1020
        %v1157 = vpop.f32.mrb[0].mxu0
        %v1158 = vadd.f32 0.0, %v1157
        %v1159 = vpop.f32.mrb[0].mxu0
        %v1160 = vpop.f32.mrb[0].mxu0
        %v1161 = vadd.f32 0.0, %v1160
        %v1162 = vpop.f32.mrb[0].mxu0
        %1163 = vmatprep.mubr.bf16.mxu0 %v1074
        %1164 = vmatmul.mubr.bf16.gmra.mrb[0].mxu0 %v1022
        %v1165 = vpop.f32.mrb[0].mxu0
        %v1166 = vadd.f32 0.0, %v1165
        %v1167 = vpop.f32.mrb[0].mxu0
        %v1168 = vpop.f32.mrb[0].mxu0
        %v1169 = vadd.f32 0.0, %v1168
        %v1170 = vpop.f32.mrb[0].mxu0
        %1171 = vmatprep.mubr.bf16.mxu0 %v1077
        %1172 = vmatmul.mubr.bf16.gmra.mrb[0].mxu0 %v1024
        %v1173 = vpop.f32.mrb[0].mxu0
        %v1174 = vadd.f32 0.0, %v1173
        %v1175 = vpop.f32.mrb[0].mxu0
        %v1176 = vpop.f32.mrb[0].mxu0
        %v1177 = vadd.f32 0.0, %v1176
        %v1178 = vpop.f32.mrb[0].mxu0
        %1179 = vmatprep.mubr.bf16.mxu0 %v1080
        %1180 = vmatmul.mubr.bf16.gmra.mrb[0].mxu0 %v1026
        %v1181 = vpop.f32.mrb[0].mxu0
        %v1182 = vadd.f32 0.0, %v1181
        %v1183 = vpop.f32.mrb[0].mxu0
        %v1184 = vpop.f32.mrb[0].mxu0
        %v1185 = vadd.f32 0.0, %v1184
        %v1186 = vpop.f32.mrb[0].mxu0
        %1187 = vmatprep.mubr.bf16.mxu0 %v1083
        %1188 = vmatmul.mubr.bf16.gmra.mrb[0].mxu0 %v1028
        %v1189 = vpop.f32.mrb[0].mxu0
        %v1190 = vadd.f32 0.0, %v1189
        %v1191 = vpop.f32.mrb[0].mxu0
        %v1192 = vpop.f32.mrb[0].mxu0
        %v1193 = vadd.f32 0.0, %v1192
        %v1194 = vpop.f32.mrb[0].mxu0
        %1195 = vmatprep.mubr.bf16.mxu0 %v1086
        %1196 = vmatmul.mubr.bf16.gmra.mrb[0].mxu0 %v1030
        %v1197 = vpop.f32.mrb[0].mxu0
        %v1198 = vadd.f32 0.0, %v1197
        %v1199 = vpop.f32.mrb[0].mxu0
        %v1200 = vpop.f32.mrb[0].mxu0
        %v1201 = vadd.f32 0.0, %v1200
        %v1202 = vpop.f32.mrb[0].mxu0
        %1203 = vmatprep.mubr.bf16.mxu0 %v1089
        %1204 = vmatmul.mubr.bf16.gmra.mrb[0].mxu0 %v1032
        %v1205 = vpop.f32.mrb[0].mxu0
        %v1206 = vadd.f32 0.0, %v1205
        %v1207 = vpop.f32.mrb[0].mxu0
        %v1208 = vpop.f32.mrb[0].mxu0
        %v1209 = vadd.f32 0.0, %v1208
        %v1210 = vpop.f32.mrb[0].mxu0
        %1211 = vmatprep.mubr.bf16.mxu0 %v1092
        %1212 = vmatmul.mubr.bf16.gmra.mrb[0].mxu0 %v1034
        %v1213 = vpop.f32.mrb[0].mxu0
        %v1214 = vadd.f32 0.0, %v1213
        %v1215 = vpop.f32.mrb[0].mxu0
        %v1216 = vpop.f32.mrb[0].mxu0
        %v1217 = vadd.f32 0.0, %v1216
        %v1218 = vpop.f32.mrb[0].mxu0
        %1219 = vmatprep.mubr.bf16.mxu0 %v1095
        %1220 = vmatmul.mubr.bf16.gmra.mrb[0].mxu0 %v1036
        %v1221 = vpop.f32.mrb[0].mxu0
        %v1222 = vadd.f32 0.0, %v1221
        %v1223 = vpop.f32.mrb[0].mxu0
        %v1224 = vpop.f32.mrb[0].mxu0
        %v1225 = vadd.f32 0.0, %v1224
        %v1226 = vpop.f32.mrb[0].mxu0
        %1227 = vmatprep.mubr.bf16.mxu0 %v1098
        %1228 = vmatmul.mubr.bf16.gmra.mrb[0].mxu0 %v1038
        %v1229 = vpop.f32.mrb[0].mxu0
        %v1230 = vadd.f32 0.0, %v1229
        %v1231 = vpop.f32.mrb[0].mxu0
        %v1232 = vpop.f32.mrb[0].mxu0
        %v1233 = vadd.f32 0.0, %v1232
        %v1234 = vpop.f32.mrb[0].mxu0
        %1235 = vmatprep.mubr.bf16.mxu0 %v1101
        %1236 = vmatmul.mubr.bf16.gmra.mrb[0].mxu0 %v1040
        %v1237 = vpop.f32.mrb[0].mxu0
        %v1238 = vadd.f32 0.0, %v1237
        %v1239 = vpop.f32.mrb[0].mxu0
        %v1240 = vpop.f32.mrb[0].mxu0
        %v1241 = vadd.f32 0.0, %v1240
        %v1242 = vpop.f32.mrb[0].mxu0
        %1243 = vmatprep.mubr.bf16.mxu0 %v1104
        %1244 = vmatmul.mubr.bf16.gmra.mrb[0].mxu0 %v1042
        %v1245 = vpop.f32.mrb[0].mxu0
        %v1246 = vadd.f32 0.0, %v1245
        %v1247 = vpop.f32.mrb[0].mxu0
        %v1248 = vpop.f32.mrb[0].mxu0
        %v1249 = vadd.f32 0.0, %v1248
        %v1250 = vpop.f32.mrb[0].mxu0
        %1251 = vmatprep.mubr.bf16.mxu0 %v1107
        %1252 = vmatmul.mubr.bf16.gmra.mrb[0].mxu0 %v1044
        %v1253 = vpop.f32.mrb[0].mxu0
        %v1254 = vadd.f32 0.0, %v1253
        %v1255 = vpop.f32.mrb[0].mxu0
        %v1256 = vpop.f32.mrb[0].mxu0
        %v1257 = vadd.f32 0.0, %v1256
        %v1258 = vpop.f32.mrb[0].mxu0
        %1259 = vmatprep.mubr.bf16.mxu0 %v1110
        %1260 = vmatmul.mubr.bf16.gmra.mrb[0].mxu0 %v1046
        %v1261 = vpop.f32.mrb[0].mxu0
        %v1262 = vadd.f32 0.0, %v1261
        %v1263 = vpop.f32.mrb[0].mxu0
        %v1264 = vpop.f32.mrb[0].mxu0
        %v1265 = vadd.f32 0.0, %v1264
        %v1266 = vpop.f32.mrb[0].mxu0
        %1267 = vmatprep.mubr.bf16.mxu0 %v1113
        %1268 = vmatmul.mubr.bf16.gmra.mrb[0].mxu0 %v1048
        %v1269 = vpop.f32.mrb[0].mxu0
        %v1270 = vadd.f32 0.0, %v1269
        %v1271 = vpop.f32.mrb[0].mxu0
        %v1272 = vpop.f32.mrb[0].mxu0
        %v1273 = vadd.f32 0.0, %v1272
        %v1274 = vpop.f32.mrb[0].mxu0
        %1275 = vdwg.mxu0
        %v1308 = vunpack.c.l.b16 %v577
        %v1309 = vunpack.c.h.b16 %v577
        %v1310 = vunpack.c.l.b16 %v578
        %v1311 = vunpack.c.h.b16 %v578
        %v1312 = vunpack.c.l.b16 %v579
        %v1313 = vunpack.c.h.b16 %v579
        %v1314 = vunpack.c.l.b16 %v580
        %v1315 = vunpack.c.h.b16 %v580
        %v1316 = vunpack.c.l.b16 %v581
        %v1317 = vunpack.c.h.b16 %v581
        %v1318 = vunpack.c.l.b16 %v582
        %v1319 = vunpack.c.h.b16 %v582
        %v1320 = vunpack.c.l.b16 %v583
        %v1321 = vunpack.c.h.b16 %v583
        %v1322 = vunpack.c.l.b16 %v584
        %v1323 = vunpack.c.h.b16 %v584
        %v1324 = vunpack.c.l.b16 %v585
        %v1325 = vunpack.c.h.b16 %v585
        %v1326 = vunpack.c.l.b16 %v586
        %v1327 = vunpack.c.h.b16 %v586
        %v1328 = vunpack.c.l.b16 %v587
        %v1329 = vunpack.c.h.b16 %v587
        %v1330 = vunpack.c.l.b16 %v588
        %v1331 = vunpack.c.h.b16 %v588
        %v1332 = vunpack.c.l.b16 %v589
        %v1333 = vunpack.c.h.b16 %v589
        %v1334 = vunpack.c.l.b16 %v590
        %v1335 = vunpack.c.h.b16 %v590
        %v1336 = vunpack.c.l.b16 %v591
        %v1337 = vunpack.c.h.b16 %v591
        %v1338 = vunpack.c.l.b16 %v592
        %v1339 = vunpack.c.h.b16 %v592
        %v1340 = vunpack.c.l.b16 %v593
        %v1341 = vunpack.c.h.b16 %v593
        %v1342 = vunpack.c.l.b16 %v594
        %v1343 = vunpack.c.h.b16 %v594
        %v1344 = vunpack.c.l.b16 %v595
        %v1345 = vunpack.c.h.b16 %v595
        %v1346 = vunpack.c.l.b16 %v596
        %v1347 = vunpack.c.h.b16 %v596
        %v1348 = vunpack.c.l.b16 %v597
        %v1349 = vunpack.c.h.b16 %v597
        %v1350 = vunpack.c.l.b16 %v598
        %v1351 = vunpack.c.h.b16 %v598
        %v1352 = vunpack.c.l.b16 %v599
        %v1353 = vunpack.c.h.b16 %v599
        %v1354 = vunpack.c.l.b16 %v600
        %v1355 = vunpack.c.h.b16 %v600
        %v1356 = vunpack.c.l.b16 %v601
        %v1357 = vunpack.c.h.b16 %v601
        %v1358 = vunpack.c.l.b16 %v602
        %v1359 = vunpack.c.h.b16 %v602
        %v1360 = vunpack.c.l.b16 %v603
        %v1361 = vunpack.c.h.b16 %v603
        %v1362 = vunpack.c.l.b16 %v604
        %v1363 = vunpack.c.h.b16 %v604
        %v1364 = vunpack.c.l.b16 %v605
        %v1365 = vunpack.c.h.b16 %v605
        %v1366 = vunpack.c.l.b16 %v606
        %v1367 = vunpack.c.h.b16 %v606
        %v1368 = vunpack.c.l.b16 %v607
        %v1369 = vunpack.c.h.b16 %v607
        %v1370 = vunpack.c.l.b16 %v608
        %v1371 = vunpack.c.h.b16 %v608
        %v1372 = vpack.c.b16 %v1310, %v1308
        %v1373 = vpack.c.b16 %v1311, %v1309
        %v1374 = vpack.c.b16 %v1314, %v1312
        %v1375 = vpack.c.b16 %v1315, %v1313
        %v1376 = vpack.c.b16 %v1318, %v1316
        %v1377 = vpack.c.b16 %v1319, %v1317
        %v1378 = vpack.c.b16 %v1322, %v1320
        %v1379 = vpack.c.b16 %v1323, %v1321
        %v1380 = vpack.c.b16 %v1326, %v1324
        %v1381 = vpack.c.b16 %v1327, %v1325
        %v1382 = vpack.c.b16 %v1330, %v1328
        %v1383 = vpack.c.b16 %v1331, %v1329
        %v1384 = vpack.c.b16 %v1334, %v1332
        %v1385 = vpack.c.b16 %v1335, %v1333
        %v1386 = vpack.c.b16 %v1338, %v1336
        %v1387 = vpack.c.b16 %v1339, %v1337
        %v1388 = vpack.c.b16 %v1342, %v1340
        %v1389 = vpack.c.b16 %v1343, %v1341
        %v1390 = vpack.c.b16 %v1346, %v1344
        %v1391 = vpack.c.b16 %v1347, %v1345
        %v1392 = vpack.c.b16 %v1350, %v1348
        %v1393 = vpack.c.b16 %v1351, %v1349
        %v1394 = vpack.c.b16 %v1354, %v1352
        %v1395 = vpack.c.b16 %v1355, %v1353
        %v1396 = vpack.c.b16 %v1358, %v1356
        %v1397 = vpack.c.b16 %v1359, %v1357
        %v1398 = vpack.c.b16 %v1362, %v1360
        %v1399 = vpack.c.b16 %v1363, %v1361
        %v1400 = vpack.c.b16 %v1366, %v1364
        %v1401 = vpack.c.b16 %v1367, %v1365
        %v1402 = vpack.c.b16 %v1370, %v1368
        %v1403 = vpack.c.b16 %v1371, %v1369
        %v1435 = vsel %vm1066, %v1373, 0
        %v1438 = vsel %vm1066, %v1375, 0
        %v1441 = vsel %vm1066, %v1377, 0
        %v1444 = vsel %vm1066, %v1379, 0
        %v1447 = vsel %vm1066, %v1381, 0
        %v1450 = vsel %vm1066, %v1383, 0
        %v1453 = vsel %vm1066, %v1385, 0
        %v1456 = vsel %vm1066, %v1387, 0
        %v1459 = vsel %vm1066, %v1389, 0
        %v1462 = vsel %vm1066, %v1391, 0
        %v1465 = vsel %vm1066, %v1393, 0
        %v1468 = vsel %vm1066, %v1395, 0
        %v1471 = vsel %vm1066, %v1397, 0
        %v1474 = vsel %vm1066, %v1399, 0
        %v1477 = vsel %vm1066, %v1401, 0
        %v1480 = vsel %vm1066, %v1403, 0
        %1482 = vmatprep.subr.bf16.mxu0 0
        %1483 = vmatpush1.bf16.msra.mxu0 %v693
        %1484 = vmatprep.subr.bf16.mxu0 0
        %1485 = vmatpush1.bf16.msra.mxu0 %v694
        %1486 = vmatprep.subr.bf16.mxu0 0
        %1487 = vmatpush1.bf16.msra.mxu0 %v695
        %1488 = vmatprep.subr.bf16.mxu0 0
        %1489 = vmatpush1.bf16.msra.mxu0 %v696
        %1490 = vmatprep.subr.bf16.mxu0 0
        %1491 = vmatpush1.bf16.msra.mxu0 %v697
        %1492 = vmatprep.subr.bf16.mxu0 0
        %1493 = vmatpush1.bf16.msra.mxu0 %v698
        %1494 = vmatprep.subr.bf16.mxu0 0
        %1495 = vmatpush1.bf16.msra.mxu0 %v699
        %1496 = vmatprep.subr.bf16.mxu0 0
        %1497 = vmatpush1.bf16.msra.mxu0 %v700
        %1498 = vmatprep.subr.bf16.mxu0 0
        %1499 = vmatpush1.bf16.msra.mxu0 %v701
        %1500 = vmatprep.subr.bf16.mxu0 0
        %1501 = vmatpush1.bf16.msra.mxu0 %v702
        %1502 = vmatprep.subr.bf16.mxu0 0
        %1503 = vmatpush1.bf16.msra.mxu0 %v703
        %1504 = vmatprep.subr.bf16.mxu0 0
        %1505 = vmatpush1.bf16.msra.mxu0 %v704
        %1506 = vmatprep.subr.bf16.mxu0 0
        %1507 = vmatpush1.bf16.msra.mxu0 %v705
        %1508 = vmatprep.subr.bf16.mxu0 0
        %1509 = vmatpush1.bf16.msra.mxu0 %v706
        %1510 = vmatprep.subr.bf16.mxu0 0
        %1511 = vmatpush1.bf16.msra.mxu0 0
        %1512 = vmatprep.subr.bf16.mxu0 0
        %1513 = vmatpush1.bf16.msra.mxu0 0
        %1514 = vmatprep.mubr.bf16.mxu0 %v1435
        %1515 = vmatmul.mubr.bf16.gmra.mrb[0].mxu0 %v1372
        %v1516 = vpop.f32.mrb[0].mxu0
        %v1517 = vadd.f32 %v1150, %v1516
        %v1518 = vpop.f32.mrb[0].mxu0
        %v1519 = vpop.f32.mrb[0].mxu0
        %v1520 = vadd.f32 %v1153, %v1519
        %v1521 = vpop.f32.mrb[0].mxu0
        %1522 = vmatprep.mubr.bf16.mxu0 %v1438
        %1523 = vmatmul.mubr.bf16.gmra.mrb[0].mxu0 %v1374
        %v1524 = vpop.f32.mrb[0].mxu0
        %v1525 = vadd.f32 %v1158, %v1524
        %v1526 = vpop.f32.mrb[0].mxu0
        %v1527 = vpop.f32.mrb[0].mxu0
        %v1528 = vadd.f32 %v1161, %v1527
        %v1529 = vpop.f32.mrb[0].mxu0
        %1530 = vmatprep.mubr.bf16.mxu0 %v1441
        %1531 = vmatmul.mubr.bf16.gmra.mrb[0].mxu0 %v1376
        %v1532 = vpop.f32.mrb[0].mxu0
        %v1533 = vadd.f32 %v1166, %v1532
        %v1534 = vpop.f32.mrb[0].mxu0
        %v1535 = vpop.f32.mrb[0].mxu0
        %v1536 = vadd.f32 %v1169, %v1535
        %v1537 = vpop.f32.mrb[0].mxu0
        %1538 = vmatprep.mubr.bf16.mxu0 %v1444
        %1539 = vmatmul.mubr.bf16.gmra.mrb[0].mxu0 %v1378
        %v1540 = vpop.f32.mrb[0].mxu0
        %v1541 = vadd.f32 %v1174, %v1540
        %v1542 = vpop.f32.mrb[0].mxu0
        %v1543 = vpop.f32.mrb[0].mxu0
        %v1544 = vadd.f32 %v1177, %v1543
        %v1545 = vpop.f32.mrb[0].mxu0
        %1546 = vmatprep.mubr.bf16.mxu0 %v1447
        %1547 = vmatmul.mubr.bf16.gmra.mrb[0].mxu0 %v1380
        %v1548 = vpop.f32.mrb[0].mxu0
        %v1549 = vadd.f32 %v1182, %v1548
        %v1550 = vpop.f32.mrb[0].mxu0
        %v1551 = vpop.f32.mrb[0].mxu0
        %v1552 = vadd.f32 %v1185, %v1551
        %v1553 = vpop.f32.mrb[0].mxu0
        %1554 = vmatprep.mubr.bf16.mxu0 %v1450
        %1555 = vmatmul.mubr.bf16.gmra.mrb[0].mxu0 %v1382
        %v1556 = vpop.f32.mrb[0].mxu0
        %v1557 = vadd.f32 %v1190, %v1556
        %v1558 = vpop.f32.mrb[0].mxu0
        %v1559 = vpop.f32.mrb[0].mxu0
        %v1560 = vadd.f32 %v1193, %v1559
        %v1561 = vpop.f32.mrb[0].mxu0
        %1562 = vmatprep.mubr.bf16.mxu0 %v1453
        %1563 = vmatmul.mubr.bf16.gmra.mrb[0].mxu0 %v1384
        %v1564 = vpop.f32.mrb[0].mxu0
        %v1565 = vadd.f32 %v1198, %v1564
        %v1566 = vpop.f32.mrb[0].mxu0
        %v1567 = vpop.f32.mrb[0].mxu0
        %v1568 = vadd.f32 %v1201, %v1567
        %v1569 = vpop.f32.mrb[0].mxu0
        %1570 = vmatprep.mubr.bf16.mxu0 %v1456
        %1571 = vmatmul.mubr.bf16.gmra.mrb[0].mxu0 %v1386
        %v1572 = vpop.f32.mrb[0].mxu0
        %v1573 = vadd.f32 %v1206, %v1572
        %v1574 = vpop.f32.mrb[0].mxu0
        %v1575 = vpop.f32.mrb[0].mxu0
        %v1576 = vadd.f32 %v1209, %v1575
        %v1577 = vpop.f32.mrb[0].mxu0
        %1578 = vmatprep.mubr.bf16.mxu0 %v1459
        %1579 = vmatmul.mubr.bf16.gmra.mrb[0].mxu0 %v1388
        %v1580 = vpop.f32.mrb[0].mxu0
        %v1581 = vadd.f32 %v1214, %v1580
        %v1582 = vpop.f32.mrb[0].mxu0
        %v1583 = vpop.f32.mrb[0].mxu0
        %v1584 = vadd.f32 %v1217, %v1583
        %v1585 = vpop.f32.mrb[0].mxu0
        %1586 = vmatprep.mubr.bf16.mxu0 %v1462
        %1587 = vmatmul.mubr.bf16.gmra.mrb[0].mxu0 %v1390
        %v1588 = vpop.f32.mrb[0].mxu0
        %v1589 = vadd.f32 %v1222, %v1588
        %v1590 = vpop.f32.mrb[0].mxu0
        %v1591 = vpop.f32.mrb[0].mxu0
        %v1592 = vadd.f32 %v1225, %v1591
        %v1593 = vpop.f32.mrb[0].mxu0
        %1594 = vmatprep.mubr.bf16.mxu0 %v1465
        %1595 = vmatmul.mubr.bf16.gmra.mrb[0].mxu0 %v1392
        %v1596 = vpop.f32.mrb[0].mxu0
        %v1597 = vadd.f32 %v1230, %v1596
        %v1598 = vpop.f32.mrb[0].mxu0
        %v1599 = vpop.f32.mrb[0].mxu0
        %v1600 = vadd.f32 %v1233, %v1599
        %v1601 = vpop.f32.mrb[0].mxu0
        %1602 = vmatprep.mubr.bf16.mxu0 %v1468
        %1603 = vmatmul.mubr.bf16.gmra.mrb[0].mxu0 %v1394
        %v1604 = vpop.f32.mrb[0].mxu0
        %v1605 = vadd.f32 %v1238, %v1604
        %v1606 = vpop.f32.mrb[0].mxu0
        %v1607 = vpop.f32.mrb[0].mxu0
        %v1608 = vadd.f32 %v1241, %v1607
        %v1609 = vpop.f32.mrb[0].mxu0
        %1610 = vmatprep.mubr.bf16.mxu0 %v1471
        %1611 = vmatmul.mubr.bf16.gmra.mrb[0].mxu0 %v1396
        %v1612 = vpop.f32.mrb[0].mxu0
        %v1613 = vadd.f32 %v1246, %v1612
        %v1614 = vpop.f32.mrb[0].mxu0
        %v1615 = vpop.f32.mrb[0].mxu0
        %v1616 = vadd.f32 %v1249, %v1615
        %v1617 = vpop.f32.mrb[0].mxu0
        %1618 = vmatprep.mubr.bf16.mxu0 %v1474
        %1619 = vmatmul.mubr.bf16.gmra.mrb[0].mxu0 %v1398
        %v1620 = vpop.f32.mrb[0].mxu0
        %v1621 = vadd.f32 %v1254, %v1620
        %v1622 = vpop.f32.mrb[0].mxu0
        %v1623 = vpop.f32.mrb[0].mxu0
        %v1624 = vadd.f32 %v1257, %v1623
        %v1625 = vpop.f32.mrb[0].mxu0
        %1626 = vmatprep.mubr.bf16.mxu0 %v1477
        %1627 = vmatmul.mubr.bf16.gmra.mrb[0].mxu0 %v1400
        %v1628 = vpop.f32.mrb[0].mxu0
        %v1629 = vadd.f32 %v1262, %v1628
        %v1630 = vpop.f32.mrb[0].mxu0
        %v1631 = vpop.f32.mrb[0].mxu0
        %v1632 = vadd.f32 %v1265, %v1631
        %v1633 = vpop.f32.mrb[0].mxu0
        %1634 = vmatprep.mubr.bf16.mxu0 %v1480
        %1635 = vmatmul.mubr.bf16.gmra.mrb[0].mxu0 %v1402
        %v1636 = vpop.f32.mrb[0].mxu0
        %v1637 = vadd.f32 %v1270, %v1636
        %v1638 = vpop.f32.mrb[0].mxu0
        %v1639 = vpop.f32.mrb[0].mxu0
        %v1640 = vadd.f32 %v1273, %v1639
        %v1641 = vpop.f32.mrb[0].mxu0
        %1642 = vdwg.mxu0
        %v1643 = vmax.f32 %v1517, 0.0
        %v1644 = vmax.f32 %v1520, 0.0
        %v1645 = vmax.f32 %v1525, 0.0
        %v1646 = vmax.f32 %v1528, 0.0
        %v1647 = vmax.f32 %v1533, 0.0
        %v1648 = vmax.f32 %v1536, 0.0
        %v1649 = vmax.f32 %v1541, 0.0
        %v1650 = vmax.f32 %v1544, 0.0
        %v1651 = vmax.f32 %v1549, 0.0
        %v1652 = vmax.f32 %v1552, 0.0
        %v1653 = vmax.f32 %v1557, 0.0
        %v1654 = vmax.f32 %v1560, 0.0
        %v1655 = vmax.f32 %v1565, 0.0
        %v1656 = vmax.f32 %v1568, 0.0
        %v1657 = vmax.f32 %v1573, 0.0
        %v1658 = vmax.f32 %v1576, 0.0
        %v1659 = vmax.f32 %v1581, 0.0
        %v1660 = vmax.f32 %v1584, 0.0
        %v1661 = vmax.f32 %v1589, 0.0
        %v1662 = vmax.f32 %v1592, 0.0
        %v1663 = vmax.f32 %v1597, 0.0
        %v1664 = vmax.f32 %v1600, 0.0
        %v1665 = vmax.f32 %v1605, 0.0
        %v1666 = vmax.f32 %v1608, 0.0
        %v1667 = vmax.f32 %v1613, 0.0
        %v1668 = vmax.f32 %v1616, 0.0
        %v1669 = vmax.f32 %v1621, 0.0
        %v1670 = vmax.f32 %v1624, 0.0
        %v1671 = vmax.f32 %v1629, 0.0
        %v1672 = vmax.f32 %v1632, 0.0
        %v1673 = vmax.f32 %v1637, 0.0
        %v1674 = vmax.f32 %v1640, 0.0
        %1675 = vst [vmem:[%s544] sm:$0xff] %v1643
        %1676 = vst [vmem:[%s544 + $0x8] sm:$0xff] %v1644
        %1677 = vst [vmem:[%s544 + $0x10] sm:$0xff] %v1645
        %1678 = vst [vmem:[%s544 + $0x18] sm:$0xff] %v1646
        %1679 = vst [vmem:[%s544 + $0x20] sm:$0xff] %v1647
        %1680 = vst [vmem:[%s544 + $0x28] sm:$0xff] %v1648
        %1681 = vst [vmem:[%s544 + $0x30] sm:$0xff] %v1649
        %1682 = vst [vmem:[%s544 + $0x38] sm:$0xff] %v1650
        %1683 = vst [vmem:[%s544 + $0x40] sm:$0xff] %v1651
        %1684 = vst [vmem:[%s544 + $0x48] sm:$0xff] %v1652
        %1685 = vst [vmem:[%s544 + $0x50] sm:$0xff] %v1653
        %1686 = vst [vmem:[%s544 + $0x58] sm:$0xff] %v1654
        %1687 = vst [vmem:[%s544 + $0x60] sm:$0xff] %v1655
        %1688 = vst [vmem:[%s544 + $0x68] sm:$0xff] %v1656
        %1689 = vst [vmem:[%s544 + $0x70] sm:$0xff] %v1657
        %1690 = vst [vmem:[%s544 + $0x78] sm:$0xff] %v1658
        %1691 = vst [vmem:[%s544 + $0x80] sm:$0xff] %v1659
        %1692 = vst [vmem:[%s544 + $0x88] sm:$0xff] %v1660
        %1693 = vst [vmem:[%s544 + $0x90] sm:$0xff] %v1661
        %1694 = vst [vmem:[%s544 + $0x98] sm:$0xff] %v1662
        %1695 = vst [vmem:[%s544 + $0xa0] sm:$0xff] %v1663
        %1696 = vst [vmem:[%s544 + $0xa8] sm:$0xff] %v1664
        %1697 = vst [vmem:[%s544 + $0xb0] sm:$0xff] %v1665
        %1698 = vst [vmem:[%s544 + $0xb8] sm:$0xff] %v1666
        %1699 = vst [vmem:[%s544 + $0xc0] sm:$0xff] %v1667
        %1700 = vst [vmem:[%s544 + $0xc8] sm:$0xff] %v1668
        %1701 = vst [vmem:[%s544 + $0xd0] sm:$0xff] %v1669
        %1702 = vst [vmem:[%s544 + $0xd8] sm:$0xff] %v1670
        %1703 = vst [vmem:[%s544 + $0xe0] sm:$0xff] %v1671
        %1704 = vst [vmem:[%s544 + $0xe8] sm:$0xff] %v1672
        %1705 = vst [vmem:[%s544 + $0xf0] sm:$0xff] %v1673
        %1706 = vst [vmem:[%s544 + $0xf8] sm:$0xff] %v1674
        %s1707 = sand.u32 %s144, 1
        %s1708 = scalar_lea.sflag [#allocation5], %s1707
        %s1709 = sand.u32 %s144, 1
        %s1710 = smul.addr %s1709, 256
        %s1711 = scalar_lea.vmem [#allocation4], %s1710
        // Predicated region
        $region119: #{encoder_forward.1} parent=109 // pred_check
          %p1712 = pneg %p154
        $region120: #{encoder_forward.1} parent=109 // pred_check_branch
          %1714 = sbr.rel (%p1712) target = $region122
        $region121: #{encoder_forward.1} parent=109 // pred_region
          %s1716 = ssub.s32 4096, 4096
          %1717 = vsyncadd %s1708, %s1716
          %s1718 = smul.addr %s22, 32
          %s1719 = sadd.s32 %s23, %s1718
          %s1720 = smul.addr %s1719, 128
          %s1721 = scalar_lea.hbm %s4, %s1720
          %s1722 = sshll.u32 %s1711, 4
          %s1723 = int_to_ptr.vmem [resolvable:$true] %s1722
          %1728 = dma.vmem_to_hbm [thread:$0]  %s1723, 4096, %s1721, %s1708, 128, 128, 8
        $region122: #{encoder_forward.1} parent=109 // pred_fallthru
          _
      $region110: #{encoder_forward.1} parent=5 // pred_fallthru
        _
      %p1729 = scmp.le.s32.totalorder 2, %s13
      // Predicated region
      $region123: #{encoder_forward.1} parent=5 // pred_check
        %p1730 = pneg %p1729
      $region124: #{encoder_forward.1} parent=5 // pred_check_branch
        %1732 = sbr.rel (%p1730) target = $region126
      $region125: #{encoder_forward.1} parent=5 // pred_region
        %s1733 = ssub.s32 %s13, 2
        // Predicated region
        $region127: #{encoder_forward.1} parent=125 // pred_check
          %p1734 = pneg %p160
        $region128: #{encoder_forward.1} parent=125 // pred_check_branch
          %1736 = sbr.rel (%p1734) target = $region130
        $region129: #{encoder_forward.1} parent=125 // pred_region
          %s1737 = sand.u32 %s145, 1
          %s1738 = scalar_lea.sflag [#allocation5], %s1737
          %s1739 = sand.u32 %s145, 1
          %s1740 = smul.addr %s1739, 256
          %s1741 = scalar_lea.vmem [#allocation4], %s1740
          %1742 = dma.done %s1738, 4096
        $region130: #{encoder_forward.1} parent=125 // pred_fallthru
          _
      $region126: #{encoder_forward.1} parent=5 // pred_fallthru
        _
    $region6: #{encoder_forward.1} parent=1 // loop_footer
      %s17 = sadd.s32 1, %s13
    $region7: #{encoder_forward.1} parent=1 // loop_footer_branch
      %12 = sbr.rel target = $region3
    $region8: #{encoder_forward.1} parent=1 // loop_exit
      _
    %1743 = vsyncpa [#allocation5], 1
    %s1744 = scalar_lea.sflag [#allocation5], 1
    %1745 = vsyncpa %s1744, 1

</llo_original>
